<compile_context>
chip_gen: v7x
topology: tpu7x:2x2x1
jax: 0.10.0
libtpu: 0.0.40
codegen_flags: <defaults>
</compile_context>

<pallas_src>
import jax
import jax.numpy as jnp
from jax.experimental import pallas as pl
from jax.experimental.pallas import tpu as pltpu

# Layer sizes from the PyTorch module.
DIMS = [784, 80, 40, 40, 20, 10]
OUT_PAD = 128       # lane-dense padded width for the final 10 logits
MAX_TILE_B = 2048   # keeps 2x f32-x tile + scratch comfortably under v7x's 64 MiB VMEM


def _round_up(n, m):
    return (n + m - 1) // m * m


def _choose_tile_b(batch, requested):
    """Batch tile: multiple of 8, capped, and >= 2 grid steps when batch allows."""
    t = _round_up(max(8, min(int(requested), MAX_TILE_B)), 8)
    if t >= batch and batch > 8:
        # Prefer >= 2 grid steps so v7x's two TensorCores / megacore both get work.
        t = _round_up(pl.cdiv(batch, 2), 8)
    return t


def _vmem_limit_bytes(tile_b):
    """Explicit VMEM budget: 2x buffered x/out tiles + resident params + intermediates."""
    act_cols = sum(DIMS[1:-1]) + OUT_PAD                       # 80+40+40+20+128
    w_elems = sum(DIMS[i] * DIMS[i + 1] for i in range(4)) + DIMS[4] * OUT_PAD
    est = (2 * tile_b * DIMS[0] * 4        # f32 x tile, double-buffered
           + 2 * tile_b * OUT_PAD * 2      # bf16 out tile, double-buffered
           + tile_b * DIMS[0] * 2          # in-kernel bf16 copy of the x tile
           + tile_b * act_cols * 6         # f32 activations + bf16 matmul copies
           + 2 * w_elems * 2               # bf16 weights (2 buffers)
           + 2 * act_cols * 4)             # f32 biases (2 buffers, overestimate)
    est += 8 << 20                         # compiler-internal scratch slack
    return int(min(max(est, 16 << 20), 48 << 20))


def mlp_kernel(x_ref,
               w1_ref, b1_ref,
               w2_ref, b2_ref,
               w3_ref, b3_ref,
               w4_ref, b4_ref,
               w5_ref, b5_ref,
               o_ref):
    """Fused 5-layer MLP over one (TILE_B, 784) batch tile (all operands in VMEM)."""
    # Layer 1: cast the f32 tile to bf16 in-kernel (no extra HBM pass), MXU with
    # f32 accumulation; bias add + ReLU (+ Dropout = identity in eval) in f32.
    x = x_ref[...].astype(jnp.bfloat16)
    h = jnp.dot(x, w1_ref[...], preferred_element_type=jnp.float32)
    h = jnp.maximum(h + b1_ref[...], 0.0)

    # Layers 2-4: bf16 operands on the MXU (single-pass), f32 accumulate/elementwise.
    for w_ref, b_ref in ((w2_ref, b2_ref), (w3_ref, b3_ref), (w4_ref, b4_ref)):
        h = jnp.dot(h.astype(jnp.bfloat16), w_ref[...],
                    preferred_element_type=jnp.float32)
        h = jnp.maximum(h + b_ref[...], 0.0)

    # Final Linear (20 -> 128 padded), no activation; lane-dense bf16 store.
    out = jnp.dot(h.astype(jnp.bfloat16), w5_ref[...],
                  preferred_element_type=jnp.float32) + b5_ref[...]
    o_ref[...] = out.astype(o_ref.dtype)


def mlp_forward(x, params, *, tile_b=MAX_TILE_B):
    """params: list of (w [in,out] f32, b [1,out] f32) tuples, length 5."""
    B = x.shape[0]
    tile_b = _choose_tile_b(B, tile_b)
    n_tiles = pl.cdiv(B, tile_b)          # ragged last tile handled by Pallas masking

    (w1, b1), (w2, b2), (w3, b3), (w4, b4), (w5, b5) = params
    # All weights feed the MXU in bf16 (tiny arrays; one-time cast).
    w1 = w1.astype(jnp.bfloat16)
    w2 = w2.astype(jnp.bfloat16)
    w3 = w3.astype(jnp.bfloat16)
    w4 = w4.astype(jnp.bfloat16)
    # Final layer padded to a lane-dense 128-wide output (unmasked stores).
    w5p = jnp.pad(w5, ((0, 0), (0, OUT_PAD - w5.shape[1]))).astype(jnp.bfloat16)
    b5p = jnp.pad(b5, ((0, 0), (0, OUT_PAD - b5.shape[1])))

    flat = [x, w1, b1, w2, b2, w3, b3, w4, b4, w5p, b5p]

    in_specs = [pl.BlockSpec((tile_b, DIMS[0]), lambda i: (i, 0))]
    for p in flat[1:]:
        # Same block index every grid step -> params stay VMEM-resident (no re-DMA).
        in_specs.append(pl.BlockSpec(p.shape, lambda i: (0, 0)))

    flops = 2 * B * sum(DIMS[i] * DIMS[i + 1] for i in range(5))
    bytes_accessed = (B * DIMS[0] * 4 + B * OUT_PAD * 2
                      + 2 * (sum(DIMS[i] * DIMS[i + 1] for i in range(4))
                             + DIMS[4] * OUT_PAD))

    out_padded = pl.pallas_call(
        mlp_kernel,
        out_shape=jax.ShapeDtypeStruct((B, OUT_PAD), jnp.bfloat16),
        grid=(n_tiles,),
        in_specs=in_specs,
        out_specs=pl.BlockSpec((tile_b, OUT_PAD), lambda i: (i, 0)),
        compiler_params=pltpu.CompilerParams(
            dimension_semantics=("parallel",),          # megacore / v7x dual-TC sharding
            vmem_limit_bytes=_vmem_limit_bytes(tile_b),
        ),
        cost_estimate=pl.CostEstimate(
            flops=flops, transcendentals=0, bytes_accessed=bytes_accessed),
    )(*flat)

    return out_padded[:B, :DIMS[-1]].astype(jnp.float32)


def init_params(key):
    """Deterministic init mimicking torch.nn.Linear default (uniform +/- 1/sqrt(in))."""
    params = []
    for i in range(len(DIMS) - 1):
        fan_in, fan_out = DIMS[i], DIMS[i + 1]
        key, kw, kb = jax.random.split(key, 3)
        bound = 1.0 / jnp.sqrt(fan_in)
        w = jax.random.uniform(kw, (fan_in, fan_out), jnp.float32, -bound, bound)
        b = jax.random.uniform(kb, (1, fan_out), jnp.float32, -bound, bound)
        params.append((w, b))
    return params


def reference_forward(x, params, *, mirror_kernel=False):
    """Pure-JAX reference. mirror_kernel reproduces the kernel's bf16 numerics."""
    h = x
    for i, (w, b) in enumerate(params):
        if mirror_kernel:
            h = h.astype(jnp.bfloat16)
            w = w.astype(jnp.bfloat16)
        h = jnp.dot(h, w, preferred_element_type=jnp.float32) + b
        if i < len(params) - 1:
            h = jnp.maximum(h, 0.0)
    if mirror_kernel:
        h = h.astype(jnp.bfloat16).astype(jnp.float32)
    return h


if __name__ == "__main__":
    key = jax.random.PRNGKey(0)
    key, kx = jax.random.split(key)

    # Deliberately not a tile multiple: exercises the ragged last block + multi-step grid.
    B = 200
    x = jax.random.normal(kx, (B, DIMS[0]), jnp.float32)
    params = init_params(key)

    out = mlp_forward(x, params, tile_b=64)   # 4 grid steps (64,64,64,8-valid)
    out = jax.block_until_ready(out)
    assert out.shape == (B, DIMS[-1])
    assert bool(jnp.all(jnp.isfinite(out)))

    # Tight check vs a reference that mirrors the kernel's bf16 matmul/output numerics.
    ref_q = reference_forward(x, params, mirror_kernel=True)
    assert jnp.allclose(out, ref_q, atol=2e-2, rtol=2e-2), "mismatch vs bf16-mirrored reference"

    # Looser check vs pure-f32 module semantics (difference = bf16 matmul rounding).
    ref = reference_forward(x, params)
    assert jnp.allclose(out, ref, atol=1e-1, rtol=1e-1), "mismatch vs f32 reference"

    # Also exercise the default (large) tile path with >=2 grid steps.
    out2 = jax.block_until_ready(mlp_forward(x, params))
    assert jnp.allclose(out2, ref_q, atol=2e-2, rtol=2e-2), "mismatch at default tile size"

    print("KERNEL_OK")
</pallas_src>

<mosaic_0001>
module attributes {stable_mosaic.version = 11 : i64} {
  func.func @mlp_kernel(%arg0: i32, %arg1: memref<64x784xf32, #tpu.memory_space<vmem>>, %arg2: memref<784x80xbf16, #tpu.memory_space<vmem>>, %arg3: memref<1x80xf32, #tpu.memory_space<vmem>>, %arg4: memref<80x40xbf16, #tpu.memory_space<vmem>>, %arg5: memref<1x40xf32, #tpu.memory_space<vmem>>, %arg6: memref<40x40xbf16, #tpu.memory_space<vmem>>, %arg7: memref<1x40xf32, #tpu.memory_space<vmem>>, %arg8: memref<40x20xbf16, #tpu.memory_space<vmem>>, %arg9: memref<1x20xf32, #tpu.memory_space<vmem>>, %arg10: memref<20x128xbf16, #tpu.memory_space<vmem>>, %arg11: memref<1x128xf32, #tpu.memory_space<vmem>>, %arg12: memref<64x128xbf16, #tpu.memory_space<vmem>>) attributes {dimension_semantics = [#tpu.dimension_semantics<parallel>], iteration_bounds = array<i64: 4>, scalar_prefetch = 0 : i64, scratch_operands = 0 : i64, tpu.core_type = #tpu.core_type<tc>, window_params = [{transform_indices = @transform_0, window_bounds = array<i64: 64, 784>}, {pipeline_mode = #tpu.pipeline_mode<synchronous>, transform_indices = @transform_1, window_bounds = array<i64: 784, 80>}, {pipeline_mode = #tpu.pipeline_mode<synchronous>, transform_indices = @transform_2, window_bounds = array<i64: 1, 80>}, {pipeline_mode = #tpu.pipeline_mode<synchronous>, transform_indices = @transform_3, window_bounds = array<i64: 80, 40>}, {pipeline_mode = #tpu.pipeline_mode<synchronous>, transform_indices = @transform_4, window_bounds = array<i64: 1, 40>}, {pipeline_mode = #tpu.pipeline_mode<synchronous>, transform_indices = @transform_5, window_bounds = array<i64: 40, 40>}, {pipeline_mode = #tpu.pipeline_mode<synchronous>, transform_indices = @transform_6, window_bounds = array<i64: 1, 40>}, {pipeline_mode = #tpu.pipeline_mode<synchronous>, transform_indices = @transform_7, window_bounds = array<i64: 40, 20>}, {pipeline_mode = #tpu.pipeline_mode<synchronous>, transform_indices = @transform_8, window_bounds = array<i64: 1, 20>}, {pipeline_mode = #tpu.pipeline_mode<synchronous>, transform_indices = @transform_9, window_bounds = array<i64: 20, 128>}, {pipeline_mode = #tpu.pipeline_mode<synchronous>, transform_indices = @transform_10, window_bounds = array<i64: 1, 128>}, {transform_indices = @transform_11, window_bounds = array<i64: 64, 128>}]} {
    %c0 = arith.constant 0 : index
    %c0_0 = arith.constant 0 : index
    %0 = vector.load %arg1[%c0, %c0_0] : memref<64x784xf32, #tpu.memory_space<vmem>>, vector<64x784xf32>
    %1 = arith.truncf %0 : vector<64x784xf32> to vector<64x784xbf16>
    %c0_1 = arith.constant 0 : index
    %c0_2 = arith.constant 0 : index
    %2 = vector.load %arg2[%c0_1, %c0_2] : memref<784x80xbf16, #tpu.memory_space<vmem>>, vector<784x80xbf16>
    %cst = arith.constant dense<0.000000e+00> : vector<64x80xf32>
    %3 = tpu.matmul %1, %2, %cst {dimension_numbers = #tpu.dot_dimension_numbers<[1], [0], [0], [1], [0, 0, 1, 1], [], []>} : vector<64x784xbf16>, vector<784x80xbf16>, vector<64x80xf32> -> vector<64x80xf32>
    %c0_3 = arith.constant 0 : index
    %c0_4 = arith.constant 0 : index
    %4 = vector.load %arg3[%c0_3, %c0_4] : memref<1x80xf32, #tpu.memory_space<vmem>>, vector<1x80xf32>
    %5 = vector.broadcast %4 : vector<1x80xf32> to vector<64x80xf32>
    %6 = arith.addf %3, %5 : vector<64x80xf32>
    %cst_5 = arith.constant 0.000000e+00 : f32
    %7 = vector.broadcast %cst_5 : f32 to vector<64x80xf32>
    %8 = arith.maximumf %6, %7 : vector<64x80xf32>
    %9 = arith.truncf %8 : vector<64x80xf32> to vector<64x80xbf16>
    %c0_6 = arith.constant 0 : index
    %c0_7 = arith.constant 0 : index
    %10 = vector.load %arg4[%c0_6, %c0_7] : memref<80x40xbf16, #tpu.memory_space<vmem>>, vector<80x40xbf16>
    %cst_8 = arith.constant dense<0.000000e+00> : vector<64x40xf32>
    %11 = tpu.matmul %9, %10, %cst_8 {dimension_numbers = #tpu.dot_dimension_numbers<[1], [0], [0], [1], [0, 0, 1, 1], [], []>} : vector<64x80xbf16>, vector<80x40xbf16>, vector<64x40xf32> -> vector<64x40xf32>
    %c0_9 = arith.constant 0 : index
    %c0_10 = arith.constant 0 : index
    %12 = vector.load %arg5[%c0_9, %c0_10] : memref<1x40xf32, #tpu.memory_space<vmem>>, vector<1x40xf32>
    %13 = vector.broadcast %12 : vector<1x40xf32> to vector<64x40xf32>
    %14 = arith.addf %11, %13 : vector<64x40xf32>
    %cst_11 = arith.constant 0.000000e+00 : f32
    %15 = vector.broadcast %cst_11 : f32 to vector<64x40xf32>
    %16 = arith.maximumf %14, %15 : vector<64x40xf32>
    %17 = arith.truncf %16 : vector<64x40xf32> to vector<64x40xbf16>
    %c0_12 = arith.constant 0 : index
    %c0_13 = arith.constant 0 : index
    %18 = vector.load %arg6[%c0_12, %c0_13] : memref<40x40xbf16, #tpu.memory_space<vmem>>, vector<40x40xbf16>
    %cst_14 = arith.constant dense<0.000000e+00> : vector<64x40xf32>
    %19 = tpu.matmul %17, %18, %cst_14 {dimension_numbers = #tpu.dot_dimension_numbers<[1], [0], [0], [1], [0, 0, 1, 1], [], []>} : vector<64x40xbf16>, vector<40x40xbf16>, vector<64x40xf32> -> vector<64x40xf32>
    %c0_15 = arith.constant 0 : index
    %c0_16 = arith.constant 0 : index
    %20 = vector.load %arg7[%c0_15, %c0_16] : memref<1x40xf32, #tpu.memory_space<vmem>>, vector<1x40xf32>
    %21 = vector.broadcast %20 : vector<1x40xf32> to vector<64x40xf32>
    %22 = arith.addf %19, %21 : vector<64x40xf32>
    %cst_17 = arith.constant 0.000000e+00 : f32
    %23 = vector.broadcast %cst_17 : f32 to vector<64x40xf32>
    %24 = arith.maximumf %22, %23 : vector<64x40xf32>
    %25 = arith.truncf %24 : vector<64x40xf32> to vector<64x40xbf16>
    %c0_18 = arith.constant 0 : index
    %c0_19 = arith.constant 0 : index
    %26 = vector.load %arg8[%c0_18, %c0_19] : memref<40x20xbf16, #tpu.memory_space<vmem>>, vector<40x20xbf16>
    %cst_20 = arith.constant dense<0.000000e+00> : vector<64x20xf32>
    %27 = tpu.matmul %25, %26, %cst_20 {dimension_numbers = #tpu.dot_dimension_numbers<[1], [0], [0], [1], [0, 0, 1, 1], [], []>} : vector<64x40xbf16>, vector<40x20xbf16>, vector<64x20xf32> -> vector<64x20xf32>
    %c0_21 = arith.constant 0 : index
    %c0_22 = arith.constant 0 : index
    %28 = vector.load %arg9[%c0_21, %c0_22] : memref<1x20xf32, #tpu.memory_space<vmem>>, vector<1x20xf32>
    %29 = vector.broadcast %28 : vector<1x20xf32> to vector<64x20xf32>
    %30 = arith.addf %27, %29 : vector<64x20xf32>
    %cst_23 = arith.constant 0.000000e+00 : f32
    %31 = vector.broadcast %cst_23 : f32 to vector<64x20xf32>
    %32 = arith.maximumf %30, %31 : vector<64x20xf32>
    %33 = arith.truncf %32 : vector<64x20xf32> to vector<64x20xbf16>
    %c0_24 = arith.constant 0 : index
    %c0_25 = arith.constant 0 : index
    %34 = vector.load %arg10[%c0_24, %c0_25] : memref<20x128xbf16, #tpu.memory_space<vmem>>, vector<20x128xbf16>
    %cst_26 = arith.constant dense<0.000000e+00> : vector<64x128xf32>
    %35 = tpu.matmul %33, %34, %cst_26 {dimension_numbers = #tpu.dot_dimension_numbers<[1], [0], [0], [1], [0, 0, 1, 1], [], []>} : vector<64x20xbf16>, vector<20x128xbf16>, vector<64x128xf32> -> vector<64x128xf32>
    %c0_27 = arith.constant 0 : index
    %c0_28 = arith.constant 0 : index
    %36 = vector.load %arg11[%c0_27, %c0_28] : memref<1x128xf32, #tpu.memory_space<vmem>>, vector<1x128xf32>
    %37 = vector.broadcast %36 : vector<1x128xf32> to vector<64x128xf32>
    %38 = arith.addf %35, %37 : vector<64x128xf32>
    %39 = arith.truncf %38 : vector<64x128xf32> to vector<64x128xbf16>
    %c0_29 = arith.constant 0 : index
    %c0_30 = arith.constant 0 : index
    %40 = vector.load %arg12[%c0_29, %c0_30] : memref<64x128xbf16, #tpu.memory_space<vmem>>, vector<64x128xbf16>
    tpu.vector_store %arg12[%c0_29, %c0_30], %39 {strides = array<i32>} : memref<64x128xbf16, #tpu.memory_space<vmem>>, vector<64x128xbf16>,
    return
  }
  func.func @transform_0(%arg0: i32) -> (i32, i32) {
    %c0_i32 = arith.constant 0 : i32
    %c0_i32_0 = arith.constant 0 : i32
    return %arg0, %c0_i32 : i32, i32
  }
  func.func @transform_1(%arg0: i32) -> (i32, i32) {
    %c0_i32 = arith.constant 0 : i32
    %c0_i32_0 = arith.constant 0 : i32
    %c0_i32_1 = arith.constant 0 : i32
    return %c0_i32, %c0_i32_0 : i32, i32
  }
  func.func @transform_2(%arg0: i32) -> (i32, i32) {
    %c0_i32 = arith.constant 0 : i32
    %c0_i32_0 = arith.constant 0 : i32
    %c0_i32_1 = arith.constant 0 : i32
    return %c0_i32, %c0_i32_0 : i32, i32
  }
  func.func @transform_3(%arg0: i32) -> (i32, i32) {
    %c0_i32 = arith.constant 0 : i32
    %c0_i32_0 = arith.constant 0 : i32
    %c0_i32_1 = arith.constant 0 : i32
    return %c0_i32, %c0_i32_0 : i32, i32
  }
  func.func @transform_4(%arg0: i32) -> (i32, i32) {
    %c0_i32 = arith.constant 0 : i32
    %c0_i32_0 = arith.constant 0 : i32
    %c0_i32_1 = arith.constant 0 : i32
    return %c0_i32, %c0_i32_0 : i32, i32
  }
  func.func @transform_5(%arg0: i32) -> (i32, i32) {
    %c0_i32 = arith.constant 0 : i32
    %c0_i32_0 = arith.constant 0 : i32
    %c0_i32_1 = arith.constant 0 : i32
    return %c0_i32, %c0_i32_0 : i32, i32
  }
  func.func @transform_6(%arg0: i32) -> (i32, i32) {
    %c0_i32 = arith.constant 0 : i32
    %c0_i32_0 = arith.constant 0 : i32
    %c0_i32_1 = arith.constant 0 : i32
    return %c0_i32, %c0_i32_0 : i32, i32
  }
  func.func @transform_7(%arg0: i32) -> (i32, i32) {
    %c0_i32 = arith.constant 0 : i32
    %c0_i32_0 = arith.constant 0 : i32
    %c0_i32_1 = arith.constant 0 : i32
    return %c0_i32, %c0_i32_0 : i32, i32
  }
  func.func @transform_8(%arg0: i32) -> (i32, i32) {
    %c0_i32 = arith.constant 0 : i32
    %c0_i32_0 = arith.constant 0 : i32
    %c0_i32_1 = arith.constant 0 : i32
    return %c0_i32, %c0_i32_0 : i32, i32
  }
  func.func @transform_9(%arg0: i32) -> (i32, i32) {
    %c0_i32 = arith.constant 0 : i32
    %c0_i32_0 = arith.constant 0 : i32
    %c0_i32_1 = arith.constant 0 : i32
    return %c0_i32, %c0_i32_0 : i32, i32
  }
  func.func @transform_10(%arg0: i32) -> (i32, i32) {
    %c0_i32 = arith.constant 0 : i32
    %c0_i32_0 = arith.constant 0 : i32
    %c0_i32_1 = arith.constant 0 : i32
    return %c0_i32, %c0_i32_0 : i32, i32
  }
  func.func @transform_11(%arg0: i32) -> (i32, i32) {
    %c0_i32 = arith.constant 0 : i32
    %c0_i32_0 = arith.constant 0 : i32
    return %arg0, %c0_i32 : i32, i32
  }
}

</mosaic_0001>

<llo_original>
// kernel: tpu_custom_call.1
$region0: #{tpu_custom_call.1}
  #allocation0 [shape = 'u32[]', space=smem, size = 0x4, offset = 0x4, fixed_abs, tag = 'smem constant byte address 0x4 - core index']
  #allocation1 [shape = 'u32[144,128]{1,0:T(1,128)}', space=vmem, size = 0x12000, scoped, tag = 'internal scratch']
  %s0 = inlined_call_operand.hbm [shape: f32[200,784], index: 0, kind: input, shape index: {}]
  %s1 = inlined_call_operand.vmem [shape: bf16[784,80], index: 1, kind: input, shape index: {}]
  %s2 = inlined_call_operand.vmem [shape: f32[1,80], index: 2, kind: input, shape index: {}]
  %s3 = inlined_call_operand.vmem [shape: bf16[80,40], index: 3, kind: input, shape index: {}]
  %s4 = inlined_call_operand.vmem [shape: f32[1,40], index: 4, kind: input, shape index: {}]
  %s5 = inlined_call_operand.vmem [shape: bf16[40,40], index: 5, kind: input, shape index: {}]
  %s6 = inlined_call_operand.vmem [shape: f32[1,40], index: 6, kind: input, shape index: {}]
  %s7 = inlined_call_operand.vmem [shape: bf16[40,20], index: 7, kind: input, shape index: {}]
  %s8 = inlined_call_operand.vmem [shape: f32[1,20], index: 8, kind: input, shape index: {}]
  %s9 = inlined_call_operand.vmem [shape: bf16[20,128], index: 9, kind: input, shape index: {}]
  %s10 = inlined_call_operand.vmem [shape: f32[1,128], index: 10, kind: input, shape index: {}]
  %s11 = inlined_call_operand.hbm [shape: bf16[200,128], index: 11, kind: output, shape index: {}]
  %s12 = sld [smem:[#allocation0]]
  $region81: #{tpu_custom_call.1} parent=0
    _
  %s14 = ssub.s32 1, %s12
  %s15 = scalar_select 0, %s14, %s12
  $region1: #{tpu_custom_call.1} parent=0
    #allocation2 [shape = 'u8[458752]{0}', space=vmem, size = 0x70000, scoped, tag = 'input window, operand 0']
    #allocation3 [shape = 's32[2]{0}', space=sflag, size = 0x8, scoped, tag = 'scoped memory for tpu_custom_call.1']
    #allocation4 [shape = 's32[2]{0}', space=sflag, size = 0x8, scoped, tag = 'scoped memory for tpu_custom_call.1']
    #allocation5 [shape = 'u8[32768]{0}', space=vmem, size = 0x8000, scoped, tag = 'output window, operand 0']
    %16 = vsyncpa [#allocation3], 0
    %s17 = scalar_lea.sflag [#allocation3], 1
    %18 = vsyncpa %s17, 0
    %19 = vsyncpa [#allocation4], 0
    %s20 = scalar_lea.sflag [#allocation4], 1
    %21 = vsyncpa %s20, 0
    loop: start=0, step=1, limit=6
    $region2: #{tpu_custom_call.1} parent=1 // loop_pre_header
      _
    $region3: #{tpu_custom_call.1} parent=1 // loop_header
      %s23 = sphi 0, %s27
      %p24 = scmp.ge.s32.totalorder %s23, 6
      %s33 = sphi 0, %s35
      %s36 = sphi 0, %s33
      %s37 = sphi 0, %s36
      %s53 = sphi 0, %s37
      %s57 = sphi 0, %s57
      %s59 = sphi 0, %s57
      %s60 = sphi 0, %s59
      %s74 = sphi 0, %s60
      %s78 = sphi 0, %s78
      %s80 = sphi 0, %s78
      %s81 = sphi 0, %s80
      %s95 = sphi 0, %s81
      %s99 = sphi 0, %s99
      %s101 = sphi 0, %s99
      %s102 = sphi 0, %s101
      %s116 = sphi 0, %s102
      %s120 = sphi 0, %s120
      %s122 = sphi 0, %s120
      %s123 = sphi 0, %s122
      %s137 = sphi 0, %s123
      %s141 = sphi 0, %s141
      %s143 = sphi 0, %s141
      %s144 = sphi 0, %s143
      %s158 = sphi 0, %s144
      %s162 = sphi 0, %s162
      %s164 = sphi 0, %s162
      %s165 = sphi 0, %s164
      %s179 = sphi 0, %s165
      %s183 = sphi 0, %s183
      %s185 = sphi 0, %s183
      %s186 = sphi 0, %s185
      %s200 = sphi 0, %s186
      %s204 = sphi 0, %s204
      %s206 = sphi 0, %s204
      %s207 = sphi 0, %s206
      %s221 = sphi 0, %s207
      %s225 = sphi 0, %s225
      %s227 = sphi 0, %s225
      %s228 = sphi 0, %s227
      %s242 = sphi 0, %s228
      %s246 = sphi 0, %s246
      %s248 = sphi 0, %s246
      %s249 = sphi 0, %s248
      %s263 = sphi 0, %s249
      %s269 = sphi 0, %s271
      %s272 = sphi 0, %s269
      %s273 = sphi 0, %s272
      %s289 = sphi 0, %s273
    $region4: #{tpu_custom_call.1} parent=1 // loop_header_branch
      %26 = sbr.rel (%p24) target = $region8
    $region5: #{tpu_custom_call.1} parent=1 // loop_body
      %s28 = ssub.s32 %s23, 1
      %s29 = ssub.s32 %s23, 2
      %s30 = sadd.s32 %s23, 1
      %s31 = ssub.s32 %s23, %s30
      %p32 = scmp.eq.s32.totalorder %s31, 0
      %s34 = sadd.s32 %s33, 1
      %s35 = scalar_select %p32, %s33, %s34
      %p38 = pneg %p32
      %p39 = scmp.eq.s32.totalorder %s23, 3
      %p40 = por %p38, %p39
      %p41 = scmp.ne.s32.totalorder %s33, %s36
      %p42 = scmp.eq.s32.totalorder %s23, 0
      %p43 = por %p41, %p42
      %p44 = scmp.ne.s32.totalorder %s33, %s36
      %p45 = scmp.eq.s32.totalorder %s28, 3
      %p46 = por %p44, %p45
      %p47 = scmp.ne.s32.totalorder %s36, %s37
      %p48 = scmp.eq.s32.totalorder %s28, 0
      %p49 = por %p47, %p48
      %p50 = scmp.ne.s32.totalorder %s36, %s37
      %p51 = scmp.eq.s32.totalorder %s29, 3
      %p52 = por %p50, %p51
      %p54 = scmp.ne.s32.totalorder %s37, %s53
      %p55 = scmp.eq.s32.totalorder %s29, 0
      %p56 = por %p54, %p55
      %s58 = sadd.s32 %s57, 1
      %p61 = scmp.eq.s32.totalorder %s23, 3
      %p62 = scmp.ne.s32.totalorder %s57, %s59
      %p63 = scmp.eq.s32.totalorder %s23, 0
      %p64 = por %p62, %p63
      %p65 = scmp.ne.s32.totalorder %s57, %s59
      %p66 = scmp.eq.s32.totalorder %s28, 3
      %p67 = por %p65, %p66
      %p68 = scmp.ne.s32.totalorder %s59, %s60
      %p69 = scmp.eq.s32.totalorder %s28, 0
      %p70 = por %p68, %p69
      %p71 = scmp.ne.s32.totalorder %s59, %s60
      %p72 = scmp.eq.s32.totalorder %s29, 3
      %p73 = por %p71, %p72
      %p75 = scmp.ne.s32.totalorder %s60, %s74
      %p76 = scmp.eq.s32.totalorder %s29, 0
      %p77 = por %p75, %p76
      %s79 = sadd.s32 %s78, 1
      %p82 = scmp.eq.s32.totalorder %s23, 3
      %p83 = scmp.ne.s32.totalorder %s78, %s80
      %p84 = scmp.eq.s32.totalorder %s23, 0
      %p85 = por %p83, %p84
      %p86 = scmp.ne.s32.totalorder %s78, %s80
      %p87 = scmp.eq.s32.totalorder %s28, 3
      %p88 = por %p86, %p87
      %p89 = scmp.ne.s32.totalorder %s80, %s81
      %p90 = scmp.eq.s32.totalorder %s28, 0
      %p91 = por %p89, %p90
      %p92 = scmp.ne.s32.totalorder %s80, %s81
      %p93 = scmp.eq.s32.totalorder %s29, 3
      %p94 = por %p92, %p93
      %p96 = scmp.ne.s32.totalorder %s81, %s95
      %p97 = scmp.eq.s32.totalorder %s29, 0
      %p98 = por %p96, %p97
      %s100 = sadd.s32 %s99, 1
      %p103 = scmp.eq.s32.totalorder %s23, 3
      %p104 = scmp.ne.s32.totalorder %s99, %s101
      %p105 = scmp.eq.s32.totalorder %s23, 0
      %p106 = por %p104, %p105
      %p107 = scmp.ne.s32.totalorder %s99, %s101
      %p108 = scmp.eq.s32.totalorder %s28, 3
      %p109 = por %p107, %p108
      %p110 = scmp.ne.s32.totalorder %s101, %s102
      %p111 = scmp.eq.s32.totalorder %s28, 0
      %p112 = por %p110, %p111
      %p113 = scmp.ne.s32.totalorder %s101, %s102
      %p114 = scmp.eq.s32.totalorder %s29, 3
      %p115 = por %p113, %p114
      %p117 = scmp.ne.s32.totalorder %s102, %s116
      %p118 = scmp.eq.s32.totalorder %s29, 0
      %p119 = por %p117, %p118
      %s121 = sadd.s32 %s120, 1
      %p124 = scmp.eq.s32.totalorder %s23, 3
      %p125 = scmp.ne.s32.totalorder %s120, %s122
      %p126 = scmp.eq.s32.totalorder %s23, 0
      %p127 = por %p125, %p126
      %p128 = scmp.ne.s32.totalorder %s120, %s122
      %p129 = scmp.eq.s32.totalorder %s28, 3
      %p130 = por %p128, %p129
      %p131 = scmp.ne.s32.totalorder %s122, %s123
      %p132 = scmp.eq.s32.totalorder %s28, 0
      %p133 = por %p131, %p132
      %p134 = scmp.ne.s32.totalorder %s122, %s123
      %p135 = scmp.eq.s32.totalorder %s29, 3
      %p136 = por %p134, %p135
      %p138 = scmp.ne.s32.totalorder %s123, %s137
      %p139 = scmp.eq.s32.totalorder %s29, 0
      %p140 = por %p138, %p139
      %s142 = sadd.s32 %s141, 1
      %p145 = scmp.eq.s32.totalorder %s23, 3
      %p146 = scmp.ne.s32.totalorder %s141, %s143
      %p147 = scmp.eq.s32.totalorder %s23, 0
      %p148 = por %p146, %p147
      %p149 = scmp.ne.s32.totalorder %s141, %s143
      %p150 = scmp.eq.s32.totalorder %s28, 3
      %p151 = por %p149, %p150
      %p152 = scmp.ne.s32.totalorder %s143, %s144
      %p153 = scmp.eq.s32.totalorder %s28, 0
      %p154 = por %p152, %p153
      %p155 = scmp.ne.s32.totalorder %s143, %s144
      %p156 = scmp.eq.s32.totalorder %s29, 3
      %p157 = por %p155, %p156
      %p159 = scmp.ne.s32.totalorder %s144, %s158
      %p160 = scmp.eq.s32.totalorder %s29, 0
      %p161 = por %p159, %p160
      %s163 = sadd.s32 %s162, 1
      %p166 = scmp.eq.s32.totalorder %s23, 3
      %p167 = scmp.ne.s32.totalorder %s162, %s164
      %p168 = scmp.eq.s32.totalorder %s23, 0
      %p169 = por %p167, %p168
      %p170 = scmp.ne.s32.totalorder %s162, %s164
      %p171 = scmp.eq.s32.totalorder %s28, 3
      %p172 = por %p170, %p171
      %p173 = scmp.ne.s32.totalorder %s164, %s165
      %p174 = scmp.eq.s32.totalorder %s28, 0
      %p175 = por %p173, %p174
      %p176 = scmp.ne.s32.totalorder %s164, %s165
      %p177 = scmp.eq.s32.totalorder %s29, 3
      %p178 = por %p176, %p177
      %p180 = scmp.ne.s32.totalorder %s165, %s179
      %p181 = scmp.eq.s32.totalorder %s29, 0
      %p182 = por %p180, %p181
      %s184 = sadd.s32 %s183, 1
      %p187 = scmp.eq.s32.totalorder %s23, 3
      %p188 = scmp.ne.s32.totalorder %s183, %s185
      %p189 = scmp.eq.s32.totalorder %s23, 0
      %p190 = por %p188, %p189
      %p191 = scmp.ne.s32.totalorder %s183, %s185
      %p192 = scmp.eq.s32.totalorder %s28, 3
      %p193 = por %p191, %p192
      %p194 = scmp.ne.s32.totalorder %s185, %s186
      %p195 = scmp.eq.s32.totalorder %s28, 0
      %p196 = por %p194, %p195
      %p197 = scmp.ne.s32.totalorder %s185, %s186
      %p198 = scmp.eq.s32.totalorder %s29, 3
      %p199 = por %p197, %p198
      %p201 = scmp.ne.s32.totalorder %s186, %s200
      %p202 = scmp.eq.s32.totalorder %s29, 0
      %p203 = por %p201, %p202
      %s205 = sadd.s32 %s204, 1
      %p208 = scmp.eq.s32.totalorder %s23, 3
      %p209 = scmp.ne.s32.totalorder %s204, %s206
      %p210 = scmp.eq.s32.totalorder %s23, 0
      %p211 = por %p209, %p210
      %p212 = scmp.ne.s32.totalorder %s204, %s206
      %p213 = scmp.eq.s32.totalorder %s28, 3
      %p214 = por %p212, %p213
      %p215 = scmp.ne.s32.totalorder %s206, %s207
      %p216 = scmp.eq.s32.totalorder %s28, 0
      %p217 = por %p215, %p216
      %p218 = scmp.ne.s32.totalorder %s206, %s207
      %p219 = scmp.eq.s32.totalorder %s29, 3
      %p220 = por %p218, %p219
      %p222 = scmp.ne.s32.totalorder %s207, %s221
      %p223 = scmp.eq.s32.totalorder %s29, 0
      %p224 = por %p222, %p223
      %s226 = sadd.s32 %s225, 1
      %p229 = scmp.eq.s32.totalorder %s23, 3
      %p230 = scmp.ne.s32.totalorder %s225, %s227
      %p231 = scmp.eq.s32.totalorder %s23, 0
      %p232 = por %p230, %p231
      %p233 = scmp.ne.s32.totalorder %s225, %s227
      %p234 = scmp.eq.s32.totalorder %s28, 3
      %p235 = por %p233, %p234
      %p236 = scmp.ne.s32.totalorder %s227, %s228
      %p237 = scmp.eq.s32.totalorder %s28, 0
      %p238 = por %p236, %p237
      %p239 = scmp.ne.s32.totalorder %s227, %s228
      %p240 = scmp.eq.s32.totalorder %s29, 3
      %p241 = por %p239, %p240
      %p243 = scmp.ne.s32.totalorder %s228, %s242
      %p244 = scmp.eq.s32.totalorder %s29, 0
      %p245 = por %p243, %p244
      %s247 = sadd.s32 %s246, 1
      %p250 = scmp.eq.s32.totalorder %s23, 3
      %p251 = scmp.ne.s32.totalorder %s246, %s248
      %p252 = scmp.eq.s32.totalorder %s23, 0
      %p253 = por %p251, %p252
      %p254 = scmp.ne.s32.totalorder %s246, %s248
      %p255 = scmp.eq.s32.totalorder %s28, 3
      %p256 = por %p254, %p255
      %p257 = scmp.ne.s32.totalorder %s248, %s249
      %p258 = scmp.eq.s32.totalorder %s28, 0
      %p259 = por %p257, %p258
      %p260 = scmp.ne.s32.totalorder %s248, %s249
      %p261 = scmp.eq.s32.totalorder %s29, 3
      %p262 = por %p260, %p261
      %p264 = scmp.ne.s32.totalorder %s249, %s263
      %p265 = scmp.eq.s32.totalorder %s29, 0
      %p266 = por %p264, %p265
      %s267 = ssub.s32 %s23, %s30
      %p268 = scmp.eq.s32.totalorder %s267, 0
      %s270 = sadd.s32 %s269, 1
      %s271 = scalar_select %p268, %s269, %s270
      %p274 = pneg %p268
      %p275 = scmp.eq.s32.totalorder %s23, 3
      %p276 = por %p274, %p275
      %p277 = scmp.ne.s32.totalorder %s269, %s272
      %p278 = scmp.eq.s32.totalorder %s23, 0
      %p279 = por %p277, %p278
      %p280 = scmp.ne.s32.totalorder %s269, %s272
      %p281 = scmp.eq.s32.totalorder %s28, 3
      %p282 = por %p280, %p281
      %p283 = scmp.ne.s32.totalorder %s272, %s273
      %p284 = scmp.eq.s32.totalorder %s28, 0
      %p285 = por %p283, %p284
      %p286 = scmp.ne.s32.totalorder %s272, %s273
      %p287 = scmp.eq.s32.totalorder %s29, 3
      %p288 = por %p286, %p287
      %p290 = scmp.ne.s32.totalorder %s273, %s289
      %p291 = scmp.eq.s32.totalorder %s29, 0
      %p292 = por %p290, %p291
      %p293 = scmp.le.s32.totalorder 1, %s23
      %p294 = scmp.lt.s32.totalorder %s23, 5
      %p295 = pnand %p293, %p294
      %p296 = pneg %p295
      // Predicated region
      $region9: #{tpu_custom_call.1} parent=5 // pred_check
        _
      $region10: #{tpu_custom_call.1} parent=5 // pred_check_branch
        %298 = sbr.rel (%p295) target = $region12
      $region11: #{tpu_custom_call.1} parent=5 // pred_region
        %s299 = ssub.s32 %s23, 1
        // Predicated region
        $region13: #{tpu_custom_call.1} parent=11 // pred_check
          %p300 = pneg %p70
        $region14: #{tpu_custom_call.1} parent=11 // pred_check_branch
          %302 = sbr.rel (%p300) target = $region16
        $region15: #{tpu_custom_call.1} parent=11 // pred_region
          _
        $region16: #{tpu_custom_call.1} parent=11 // pred_fallthru
          _
        // Predicated region
        $region17: #{tpu_custom_call.1} parent=11 // pred_check
          %p303 = pneg %p91
        $region18: #{tpu_custom_call.1} parent=11 // pred_check_branch
          %305 = sbr.rel (%p303) target = $region20
        $region19: #{tpu_custom_call.1} parent=11 // pred_region
          _
        $region20: #{tpu_custom_call.1} parent=11 // pred_fallthru
          _
        // Predicated region
        $region21: #{tpu_custom_call.1} parent=11 // pred_check
          %p306 = pneg %p112
        $region22: #{tpu_custom_call.1} parent=11 // pred_check_branch
          %308 = sbr.rel (%p306) target = $region24
        $region23: #{tpu_custom_call.1} parent=11 // pred_region
          _
        $region24: #{tpu_custom_call.1} parent=11 // pred_fallthru
          _
        // Predicated region
        $region25: #{tpu_custom_call.1} parent=11 // pred_check
          %p309 = pneg %p133
        $region26: #{tpu_custom_call.1} parent=11 // pred_check_branch
          %311 = sbr.rel (%p309) target = $region28
        $region27: #{tpu_custom_call.1} parent=11 // pred_region
          _
        $region28: #{tpu_custom_call.1} parent=11 // pred_fallthru
          _
        // Predicated region
        $region29: #{tpu_custom_call.1} parent=11 // pred_check
          %p312 = pneg %p154
        $region30: #{tpu_custom_call.1} parent=11 // pred_check_branch
          %314 = sbr.rel (%p312) target = $region32
        $region31: #{tpu_custom_call.1} parent=11 // pred_region
          _
        $region32: #{tpu_custom_call.1} parent=11 // pred_fallthru
          _
        // Predicated region
        $region33: #{tpu_custom_call.1} parent=11 // pred_check
          %p315 = pneg %p175
        $region34: #{tpu_custom_call.1} parent=11 // pred_check_branch
          %317 = sbr.rel (%p315) target = $region36
        $region35: #{tpu_custom_call.1} parent=11 // pred_region
          _
        $region36: #{tpu_custom_call.1} parent=11 // pred_fallthru
          _
        // Predicated region
        $region37: #{tpu_custom_call.1} parent=11 // pred_check
          %p318 = pneg %p196
        $region38: #{tpu_custom_call.1} parent=11 // pred_check_branch
          %320 = sbr.rel (%p318) target = $region40
        $region39: #{tpu_custom_call.1} parent=11 // pred_region
          _
        $region40: #{tpu_custom_call.1} parent=11 // pred_fallthru
          _
        // Predicated region
        $region41: #{tpu_custom_call.1} parent=11 // pred_check
          %p321 = pneg %p217
        $region42: #{tpu_custom_call.1} parent=11 // pred_check_branch
          %323 = sbr.rel (%p321) target = $region44
        $region43: #{tpu_custom_call.1} parent=11 // pred_region
          _
        $region44: #{tpu_custom_call.1} parent=11 // pred_fallthru
          _
        // Predicated region
        $region45: #{tpu_custom_call.1} parent=11 // pred_check
          %p324 = pneg %p238
        $region46: #{tpu_custom_call.1} parent=11 // pred_check_branch
          %326 = sbr.rel (%p324) target = $region48
        $region47: #{tpu_custom_call.1} parent=11 // pred_region
          _
        $region48: #{tpu_custom_call.1} parent=11 // pred_fallthru
          _
        // Predicated region
        $region49: #{tpu_custom_call.1} parent=11 // pred_check
          %p327 = pneg %p259
        $region50: #{tpu_custom_call.1} parent=11 // pred_check_branch
          %329 = sbr.rel (%p327) target = $region52
        $region51: #{tpu_custom_call.1} parent=11 // pred_region
          _
        $region52: #{tpu_custom_call.1} parent=11 // pred_fallthru
          _
      $region12: #{tpu_custom_call.1} parent=5 // pred_fallthru
        _
      %p330 = scmp.lt.s32.totalorder %s23, 4
      // Predicated region
      $region53: #{tpu_custom_call.1} parent=5 // pred_check
        %p331 = pneg %p330
      $region54: #{tpu_custom_call.1} parent=5 // pred_check_branch
        %333 = sbr.rel (%p331) target = $region56
      $region55: #{tpu_custom_call.1} parent=5 // pred_region
        // Predicated region
        $region57: #{tpu_custom_call.1} parent=55 // pred_check
          %p334 = pneg %p43
        $region58: #{tpu_custom_call.1} parent=55 // pred_check_branch
          %336 = sbr.rel (%p334) target = $region60
        $region59: #{tpu_custom_call.1} parent=55 // pred_region
          %s337 = sand.u32 %s33, 1
          %s338 = scalar_lea.sflag [#allocation3], %s337
          %s339 = sand.u32 %s33, 1
          %s340 = smul.addr %s339, 448
          %s341 = scalar_lea.vmem [#allocation2], %s340
          %s342 = smul.u32 8, %s23
          %s343 = ssub.s32 25, %s342
          %p344 = scmp.lt.s32.totalorder %s343, 8
          %s345 = scalar_select %p344, %s343, 8
          %s346 = smul.u32 128, %s345
          %s347 = smul.u32 %s346, 7
          %s349 = ssub.s32 7168, %s347
          %350 = vsyncadd %s338, %s349
          %p351 = scmp.ne.s32.totalorder 0, %s347
          %s352 = smul.addr %s342, 7
          %s353 = smul.addr %s352, 128
          %s354 = scalar_lea.hbm %s0, %s353
          %s355 = smul.u32 56, %s345
          %s356 = sshll.u32 %s341, 4
          %s357 = int_to_ptr.vmem [resolvable:$true] %s356
          %s358 = sshll.u32 %s355, 4
          %362 = dma.hbm_to_vmem [thread:$0]  (%p351), %s354, %s358, %s357, %s338, 896, 896, 56
        $region60: #{tpu_custom_call.1} parent=55 // pred_fallthru
          _
      $region56: #{tpu_custom_call.1} parent=5 // pred_fallthru
        _
      %p363 = scmp.le.s32.totalorder 1, %s23
      %p364 = scmp.lt.s32.totalorder %s23, 5
      %p365 = pnand %p363, %p364
      %p366 = pneg %p365
      // Predicated region
      $region61: #{tpu_custom_call.1} parent=5 // pred_check
        _
      $region62: #{tpu_custom_call.1} parent=5 // pred_check_branch
        %368 = sbr.rel (%p365) target = $region64
      $region63: #{tpu_custom_call.1} parent=5 // pred_region
        %s369 = ssub.s32 %s23, 1
        %s370 = sand.u32 %s36, 1
        %s371 = scalar_lea.sflag [#allocation3], %s370
        %s372 = sand.u32 %s36, 1
        %s373 = smul.addr %s372, 448
        %s374 = scalar_lea.vmem [#allocation2], %s373
        // Predicated region
        $region65: #{tpu_custom_call.1} parent=63 // pred_check
          %p375 = pneg %p49
        $region66: #{tpu_custom_call.1} parent=63 // pred_check_branch
          %377 = sbr.rel (%p375) target = $region68
        $region67: #{tpu_custom_call.1} parent=63 // pred_region
          %378 = dma.done %s371, 7168
        $region68: #{tpu_custom_call.1} parent=63 // pred_fallthru
          _
        %s379 = sand.u32 %s36, 1
        %s380 = scalar_lea.sflag [#allocation3], %s379
        %s381 = sand.u32 %s36, 1
        %s382 = smul.addr %s381, 448
        %s383 = scalar_lea.vmem [#allocation2], %s382
        %p384 = pneg %p49
        %p385 = pneg %p46
        %p386 = pneg %p70
        %p387 = pneg %p67
        %p388 = pneg %p91
        %p389 = pneg %p88
        %p390 = pneg %p112
        %p391 = pneg %p109
        %p392 = pneg %p133
        %p393 = pneg %p130
        %p394 = pneg %p154
        %p395 = pneg %p151
        %p396 = pneg %p175
        %p397 = pneg %p172
        %p398 = pneg %p196
        %p399 = pneg %p193
        %p400 = pneg %p217
        %p401 = pneg %p214
        %p402 = pneg %p238
        %p403 = pneg %p235
        %p404 = pneg %p259
        %p405 = pneg %p256
        %p406 = pneg %p285
        %p407 = pneg %p282
        %s408 = sand.u32 %s272, 1
        %s409 = scalar_lea.sflag [#allocation4], %s408
        %s410 = sand.u32 %s272, 1
        %s411 = smul.addr %s410, 32
        %s412 = scalar_lea.vmem [#allocation5], %s411
        %s413 = smul.u32 8, %s28
        %s414 = ssub.s32 25, %s413
        %p415 = scmp.lt.s32.totalorder %s414, 8
        %s416 = scalar_select %p415, %s414, 8
        %s417 = smul.u32 128, %s416
        %s418 = smul.u32 %s417, 7
        %s419 = smul.u32 8, %s28
        %s420 = ssub.s32 25, %s419
        %p421 = scmp.lt.s32.totalorder %s420, 8
        %s422 = scalar_select %p421, %s420, 8
        %s423 = smul.u32 64, %s422
        %v425 = vld [vmem:[%s374] sm:$0xff]
        %v426 = vld [vmem:[%s374 + $0x8] sm:$0xff]
        %v427 = vld [vmem:[%s374 + $0x10] sm:$0xff]
        %v428 = vld [vmem:[%s374 + $0x18] sm:$0xff]
        %v429 = vld [vmem:[%s374 + $0x20] sm:$0xff]
        %v430 = vld [vmem:[%s374 + $0x28] sm:$0xff]
        %v431 = vld [vmem:[%s374 + $0x30] sm:$0xff]
        %v432 = vld [vmem:[%s374 + $0x38] sm:$0xff]
        %v433 = vld [vmem:[%s374 + $0x40] sm:$0xff]
        %v434 = vld [vmem:[%s374 + $0x48] sm:$0xff]
        %v435 = vld [vmem:[%s374 + $0x50] sm:$0xff]
        %v436 = vld [vmem:[%s374 + $0x58] sm:$0xff]
        %v437 = vld [vmem:[%s374 + $0x60] sm:$0xff]
        %v438 = vld [vmem:[%s374 + $0x68] sm:$0xff]
        %v439 = vld [vmem:[%s374 + $0x70] sm:$0xff]
        %v440 = vld [vmem:[%s374 + $0x78] sm:$0xff]
        %v441 = vld [vmem:[%s374 + $0x80] sm:$0xff]
        %v442 = vld [vmem:[%s374 + $0x88] sm:$0xff]
        %v443 = vld [vmem:[%s374 + $0x90] sm:$0xff]
        %v444 = vld [vmem:[%s374 + $0x98] sm:$0xff]
        %v445 = vld [vmem:[%s374 + $0xa0] sm:$0xff]
        %v446 = vld [vmem:[%s374 + $0xa8] sm:$0xff]
        %v447 = vld [vmem:[%s374 + $0xb0] sm:$0xff]
        %v448 = vld [vmem:[%s374 + $0xb8] sm:$0xff]
        %v449 = vld [vmem:[%s374 + $0xc0] sm:$0xff]
        %v450 = vld [vmem:[%s374 + $0xc8] sm:$0xff]
        %v451 = vld [vmem:[%s374 + $0xd0] sm:$0xff]
        %v452 = vld [vmem:[%s374 + $0xd8] sm:$0xff]
        %v453 = vld [vmem:[%s374 + $0xe0] sm:$0xff]
        %v454 = vld [vmem:[%s374 + $0xe8] sm:$0xff]
        %v455 = vld [vmem:[%s374 + $0xf0] sm:$0xff]
        %v456 = vld [vmem:[%s374 + $0xf8] sm:$0xff]
        %v457 = vld [vmem:[%s374 + $0x100] sm:$0xff]
        %v458 = vld [vmem:[%s374 + $0x108] sm:$0xff]
        %v459 = vld [vmem:[%s374 + $0x110] sm:$0xff]
        %v460 = vld [vmem:[%s374 + $0x118] sm:$0xff]
        %v461 = vld [vmem:[%s374 + $0x120] sm:$0xff]
        %v462 = vld [vmem:[%s374 + $0x128] sm:$0xff]
        %v463 = vld [vmem:[%s374 + $0x130] sm:$0xff]
        %v464 = vld [vmem:[%s374 + $0x138] sm:$0xff]
        %v465 = vld [vmem:[%s374 + $0x140] sm:$0xff]
        %v466 = vld [vmem:[%s374 + $0x148] sm:$0xff]
        %v467 = vld [vmem:[%s374 + $0x150] sm:$0xff]
        %v468 = vld [vmem:[%s374 + $0x158] sm:$0xff]
        %v469 = vld [vmem:[%s374 + $0x160] sm:$0xff]
        %v470 = vld [vmem:[%s374 + $0x168] sm:$0xff]
        %v471 = vld [vmem:[%s374 + $0x170] sm:$0xff]
        %v472 = vld [vmem:[%s374 + $0x178] sm:$0xff]
        %v473 = vld [vmem:[%s374 + $0x180] sm:$0xff]
        %v474 = vld [vmem:[%s374 + $0x188] sm:$0xff]
        %v475 = vld [vmem:[%s374 + $0x190] sm:$0xff]
        %v476 = vld [vmem:[%s374 + $0x198] sm:$0xff]
        %v477 = vld [vmem:[%s374 + $0x1a0] sm:$0xff]
        %v478 = vld [vmem:[%s374 + $0x1a8] sm:$0xff]
        %v479 = vld [vmem:[%s374 + $0x1b0] sm:$0xff]
        %v480 = vld [vmem:[%s374 + $0x1b8] sm:$0xff]
        %v481 = vpack.c.bf16 %v432, %v425
        %v482 = vpack.c.bf16 %v433, %v426
        %v483 = vpack.c.bf16 %v434, %v427
        %v484 = vpack.c.bf16 %v435, %v428
        %v485 = vpack.c.bf16 %v436, %v429
        %v486 = vpack.c.bf16 %v437, %v430
        %v487 = vpack.c.bf16 %v438, %v431
        %v488 = vpack.c.bf16 %v446, %v439
        %v489 = vpack.c.bf16 %v447, %v440
        %v490 = vpack.c.bf16 %v448, %v441
        %v491 = vpack.c.bf16 %v449, %v442
        %v492 = vpack.c.bf16 %v450, %v443
        %v493 = vpack.c.bf16 %v451, %v444
        %v494 = vpack.c.bf16 %v452, %v445
        %v495 = vpack.c.bf16 %v460, %v453
        %v496 = vpack.c.bf16 %v461, %v454
        %v497 = vpack.c.bf16 %v462, %v455
        %v498 = vpack.c.bf16 %v463, %v456
        %v499 = vpack.c.bf16 %v464, %v457
        %v500 = vpack.c.bf16 %v465, %v458
        %v501 = vpack.c.bf16 %v466, %v459
        %v502 = vpack.c.bf16 %v474, %v467
        %v503 = vpack.c.bf16 %v475, %v468
        %v504 = vpack.c.bf16 %v476, %v469
        %v505 = vpack.c.bf16 %v477, %v470
        %v506 = vpack.c.bf16 %v478, %v471
        %v507 = vpack.c.bf16 %v479, %v472
        %v508 = vpack.c.bf16 %v480, %v473
        %v509 = vld [vmem:[%s1] sm:$0xf]
        %v510 = vld [vmem:[%s1 + $0x4] sm:$0xf]
        %v511 = vld [vmem:[%s1 + $0x8] sm:$0xf]
        %v512 = vld [vmem:[%s1 + $0xc] sm:$0xf]
        %v513 = vld [vmem:[%s1 + $0x10] sm:$0xf]
        %v514 = vld [vmem:[%s1 + $0x14] sm:$0xf]
        %v515 = vld [vmem:[%s1 + $0x18] sm:$0xf]
        %v516 = vld [vmem:[%s1 + $0x1c] sm:$0xf]
        %v517 = vld [vmem:[%s1 + $0x20] sm:$0xf]
        %v518 = vld [vmem:[%s1 + $0x24] sm:$0xf]
        %v519 = vld [vmem:[%s1 + $0x28] sm:$0xf]
        %v520 = vld [vmem:[%s1 + $0x2c] sm:$0xf]
        %v521 = vld [vmem:[%s1 + $0x30] sm:$0xf]
        %v522 = vld [vmem:[%s1 + $0x34] sm:$0xf]
        %v523 = vld [vmem:[%s1 + $0x38] sm:$0xf]
        %v524 = vld [vmem:[%s1 + $0x3c] sm:$0xf]
        %v525 = vld [vmem:[%s1 + $0x40] sm:$0xf]
        %v526 = vld [vmem:[%s1 + $0x44] sm:$0xf]
        %v527 = vld [vmem:[%s1 + $0x48] sm:$0xf]
        %v528 = vld [vmem:[%s1 + $0x4c] sm:$0xf]
        %v529 = vld [vmem:[%s1 + $0x50] sm:$0xf]
        %v530 = vld [vmem:[%s1 + $0x54] sm:$0xf]
        %v531 = vld [vmem:[%s1 + $0x58] sm:$0xf]
        %v532 = vld [vmem:[%s1 + $0x5c] sm:$0xf]
        %v533 = vld [vmem:[%s1 + $0x60] sm:$0xf]
        %v534 = vld [vmem:[%s1 + $0x64] sm:$0xf]
        %v535 = vld [vmem:[%s1 + $0x68] sm:$0xf]
        %v536 = vld [vmem:[%s1 + $0x6c] sm:$0xf]
        %v537 = vld [vmem:[%s1 + $0x70] sm:$0xf]
        %v538 = vld [vmem:[%s1 + $0x74] sm:$0xf]
        %v539 = vld [vmem:[%s1 + $0x78] sm:$0xf]
        %v540 = vld [vmem:[%s1 + $0x7c] sm:$0xf]
        %v541 = vld [vmem:[%s1 + $0x80] sm:$0xf]
        %v542 = vld [vmem:[%s1 + $0x84] sm:$0xf]
        %v543 = vld [vmem:[%s1 + $0x88] sm:$0xf]
        %v544 = vld [vmem:[%s1 + $0x8c] sm:$0xf]
        %v545 = vld [vmem:[%s1 + $0x90] sm:$0xf]
        %v546 = vld [vmem:[%s1 + $0x94] sm:$0xf]
        %v547 = vld [vmem:[%s1 + $0x98] sm:$0xf]
        %v548 = vld [vmem:[%s1 + $0x9c] sm:$0xf]
        %v549 = vld [vmem:[%s1 + $0xa0] sm:$0xf]
        %v550 = vld [vmem:[%s1 + $0xa4] sm:$0xf]
        %v551 = vld [vmem:[%s1 + $0xa8] sm:$0xf]
        %v552 = vld [vmem:[%s1 + $0xac] sm:$0xf]
        %v553 = vld [vmem:[%s1 + $0xb0] sm:$0xf]
        %v554 = vld [vmem:[%s1 + $0xb4] sm:$0xf]
        %v555 = vld [vmem:[%s1 + $0xb8] sm:$0xf]
        %v556 = vld [vmem:[%s1 + $0xbc] sm:$0xf]
        %v557 = vld [vmem:[%s1 + $0xc0] sm:$0xf]
        %v558 = vld [vmem:[%s1 + $0xc4] sm:$0xf]
        %v559 = vld [vmem:[%s1 + $0xc8] sm:$0xf]
        %v560 = vld [vmem:[%s1 + $0xcc] sm:$0xf]
        %v561 = vld [vmem:[%s1 + $0xd0] sm:$0xf]
        %v562 = vld [vmem:[%s1 + $0xd4] sm:$0xf]
        %v563 = vld [vmem:[%s1 + $0xd8] sm:$0xf]
        %v564 = vld [vmem:[%s1 + $0xdc] sm:$0xf]
        %v565 = vld [vmem:[%s1 + $0xe0] sm:$0xf]
        %v566 = vld [vmem:[%s1 + $0xe4] sm:$0xf]
        %v567 = vld [vmem:[%s1 + $0xe8] sm:$0xf]
        %v568 = vld [vmem:[%s1 + $0xec] sm:$0xf]
        %v569 = vld [vmem:[%s1 + $0xf0] sm:$0xf]
        %v570 = vld [vmem:[%s1 + $0xf4] sm:$0xf]
        %v571 = vld [vmem:[%s1 + $0xf8] sm:$0xf]
        %v572 = vld [vmem:[%s1 + $0xfc] sm:$0xf]
        %v573 = vld [vmem:[%s1 + $0x100] sm:$0xf]
        %v574 = vld [vmem:[%s1 + $0x104] sm:$0xf]
        %v575 = vld [vmem:[%s1 + $0x108] sm:$0xf]
        %v576 = vld [vmem:[%s1 + $0x10c] sm:$0xf]
        %v577 = vld [vmem:[%s1 + $0x110] sm:$0xf]
        %v578 = vld [vmem:[%s1 + $0x114] sm:$0xf]
        %v579 = vld [vmem:[%s1 + $0x118] sm:$0xf]
        %v580 = vld [vmem:[%s1 + $0x11c] sm:$0xf]
        %v581 = vld [vmem:[%s1 + $0x120] sm:$0xf]
        %v582 = vld [vmem:[%s1 + $0x124] sm:$0xf]
        %v583 = vld [vmem:[%s1 + $0x128] sm:$0xf]
        %v584 = vld [vmem:[%s1 + $0x12c] sm:$0xf]
        %v585 = vld [vmem:[%s1 + $0x130] sm:$0xf]
        %v586 = vld [vmem:[%s1 + $0x134] sm:$0xf]
        %v587 = vld [vmem:[%s1 + $0x138] sm:$0xf]
        %v588 = vld [vmem:[%s1 + $0x13c] sm:$0xf]
        %v589 = vld [vmem:[%s1 + $0x140] sm:$0xf]
        %v590 = vld [vmem:[%s1 + $0x144] sm:$0xf]
        %v591 = vld [vmem:[%s1 + $0x148] sm:$0xf]
        %v592 = vld [vmem:[%s1 + $0x14c] sm:$0xf]
        %v593 = vld [vmem:[%s1 + $0x150] sm:$0xf]
        %v594 = vld [vmem:[%s1 + $0x154] sm:$0xf]
        %v595 = vld [vmem:[%s1 + $0x158] sm:$0xf]
        %v596 = vld [vmem:[%s1 + $0x15c] sm:$0xf]
        %v597 = vld [vmem:[%s1 + $0x160] sm:$0xf]
        %v598 = vld [vmem:[%s1 + $0x164] sm:$0xf]
        %v599 = vld [vmem:[%s1 + $0x168] sm:$0xf]
        %v600 = vld [vmem:[%s1 + $0x16c] sm:$0xf]
        %v601 = vld [vmem:[%s1 + $0x170] sm:$0xf]
        %v602 = vld [vmem:[%s1 + $0x174] sm:$0xf]
        %v603 = vld [vmem:[%s1 + $0x178] sm:$0xf]
        %v604 = vld [vmem:[%s1 + $0x17c] sm:$0xf]
        %v605 = vld [vmem:[%s1 + $0x180] sm:$0xf]
        %v606 = vld [vmem:[%s1 + $0x184] sm:$0xf]
        %v607 = vld [vmem:[%s2] sm:$0x1]
        %v609 = vlaneseq
        %v610 = vshrl.u32 %v609, 7
        %v611 = vsub.s32 0, %v610
        %v612 = vrot.slane %v607, %v611
        %v712 = vunpack.c.l.b16 %v509
        %v713 = vunpack.c.l.b16 %v510
        %v714 = vunpack.c.l.b16 %v511
        %v715 = vunpack.c.l.b16 %v512
        %v716 = vunpack.c.l.b16 %v513
        %v717 = vunpack.c.l.b16 %v514
        %v718 = vunpack.c.l.b16 %v515
        %v719 = vunpack.c.l.b16 %v516
        %v720 = vunpack.c.l.b16 %v517
        %v721 = vunpack.c.l.b16 %v518
        %v722 = vunpack.c.l.b16 %v519
        %v723 = vunpack.c.l.b16 %v520
        %v724 = vunpack.c.l.b16 %v521
        %v725 = vunpack.c.l.b16 %v522
        %v726 = vunpack.c.l.b16 %v523
        %v727 = vunpack.c.l.b16 %v524
        %v728 = vunpack.c.l.b16 %v525
        %v729 = vunpack.c.l.b16 %v526
        %v730 = vunpack.c.l.b16 %v527
        %v731 = vunpack.c.l.b16 %v528
        %v732 = vunpack.c.l.b16 %v529
        %v733 = vunpack.c.l.b16 %v530
        %v734 = vunpack.c.l.b16 %v531
        %v735 = vunpack.c.l.b16 %v532
        %v736 = vunpack.c.l.b16 %v533
        %v737 = vunpack.c.l.b16 %v534
        %v738 = vunpack.c.l.b16 %v535
        %v739 = vunpack.c.l.b16 %v536
        %v740 = vunpack.c.l.b16 %v537
        %v741 = vunpack.c.l.b16 %v538
        %v742 = vunpack.c.l.b16 %v539
        %v743 = vunpack.c.l.b16 %v540
        %v744 = vunpack.c.l.b16 %v541
        %v745 = vunpack.c.l.b16 %v542
        %v746 = vunpack.c.l.b16 %v543
        %v747 = vunpack.c.l.b16 %v544
        %v748 = vunpack.c.l.b16 %v545
        %v749 = vunpack.c.l.b16 %v546
        %v750 = vunpack.c.l.b16 %v547
        %v751 = vunpack.c.l.b16 %v548
        %v752 = vunpack.c.l.b16 %v549
        %v753 = vunpack.c.l.b16 %v550
        %v754 = vunpack.c.l.b16 %v551
        %v755 = vunpack.c.l.b16 %v552
        %v756 = vunpack.c.l.b16 %v553
        %v757 = vunpack.c.l.b16 %v554
        %v758 = vunpack.c.l.b16 %v555
        %v759 = vunpack.c.l.b16 %v556
        %v760 = vunpack.c.l.b16 %v557
        %v761 = vunpack.c.l.b16 %v558
        %v762 = vunpack.c.l.b16 %v559
        %v763 = vunpack.c.l.b16 %v560
        %v764 = vunpack.c.l.b16 %v561
        %v765 = vunpack.c.l.b16 %v562
        %v766 = vunpack.c.l.b16 %v563
        %v767 = vunpack.c.l.b16 %v564
        %v768 = vunpack.c.l.b16 %v565
        %v769 = vunpack.c.l.b16 %v566
        %v770 = vunpack.c.l.b16 %v567
        %v771 = vunpack.c.l.b16 %v568
        %v772 = vunpack.c.l.b16 %v569
        %v773 = vunpack.c.l.b16 %v570
        %v774 = vunpack.c.l.b16 %v571
        %v775 = vunpack.c.l.b16 %v572
        %v776 = vunpack.c.l.b16 %v573
        %v777 = vunpack.c.l.b16 %v574
        %v778 = vunpack.c.l.b16 %v575
        %v779 = vunpack.c.l.b16 %v576
        %v780 = vunpack.c.l.b16 %v577
        %v781 = vunpack.c.l.b16 %v578
        %v782 = vunpack.c.l.b16 %v579
        %v783 = vunpack.c.l.b16 %v580
        %v784 = vunpack.c.l.b16 %v581
        %v785 = vunpack.c.l.b16 %v582
        %v786 = vunpack.c.l.b16 %v583
        %v787 = vunpack.c.l.b16 %v584
        %v788 = vunpack.c.l.b16 %v585
        %v789 = vunpack.c.l.b16 %v586
        %v790 = vunpack.c.l.b16 %v587
        %v791 = vunpack.c.l.b16 %v588
        %v792 = vunpack.c.l.b16 %v589
        %v793 = vunpack.c.l.b16 %v590
        %v794 = vunpack.c.l.b16 %v591
        %v795 = vunpack.c.l.b16 %v592
        %v796 = vunpack.c.l.b16 %v593
        %v797 = vunpack.c.l.b16 %v594
        %v798 = vunpack.c.l.b16 %v595
        %v799 = vunpack.c.l.b16 %v596
        %v800 = vunpack.c.l.b16 %v597
        %v801 = vunpack.c.l.b16 %v598
        %v802 = vunpack.c.l.b16 %v599
        %v803 = vunpack.c.l.b16 %v600
        %v804 = vunpack.c.l.b16 %v601
        %v805 = vunpack.c.l.b16 %v602
        %v806 = vunpack.c.l.b16 %v603
        %v807 = vunpack.c.l.b16 %v604
        %v808 = vunpack.c.l.b16 %v605
        %v809 = vunpack.c.l.b16 %v606
        %v810 = vpack.c.b16 %v713, %v712
        %v811 = vpack.c.b16 %v715, %v714
        %v812 = vpack.c.b16 %v717, %v716
        %v813 = vpack.c.b16 %v719, %v718
        %v814 = vpack.c.b16 %v721, %v720
        %v815 = vpack.c.b16 %v723, %v722
        %v816 = vpack.c.b16 %v725, %v724
        %v817 = vpack.c.b16 %v727, %v726
        %v818 = vpack.c.b16 %v729, %v728
        %v819 = vpack.c.b16 %v731, %v730
        %v820 = vpack.c.b16 %v733, %v732
        %v821 = vpack.c.b16 %v735, %v734
        %v822 = vpack.c.b16 %v737, %v736
        %v823 = vpack.c.b16 %v739, %v738
        %v824 = vpack.c.b16 %v741, %v740
        %v825 = vpack.c.b16 %v743, %v742
        %v826 = vpack.c.b16 %v745, %v744
        %v827 = vpack.c.b16 %v747, %v746
        %v828 = vpack.c.b16 %v749, %v748
        %v829 = vpack.c.b16 %v751, %v750
        %v830 = vpack.c.b16 %v753, %v752
        %v831 = vpack.c.b16 %v755, %v754
        %v832 = vpack.c.b16 %v757, %v756
        %v833 = vpack.c.b16 %v759, %v758
        %v834 = vpack.c.b16 %v761, %v760
        %v835 = vpack.c.b16 %v763, %v762
        %v836 = vpack.c.b16 %v765, %v764
        %v837 = vpack.c.b16 %v767, %v766
        %v838 = vpack.c.b16 %v769, %v768
        %v839 = vpack.c.b16 %v771, %v770
        %v840 = vpack.c.b16 %v773, %v772
        %v841 = vpack.c.b16 %v775, %v774
        %v842 = vpack.c.b16 %v777, %v776
        %v843 = vpack.c.b16 %v779, %v778
        %v844 = vpack.c.b16 %v781, %v780
        %v845 = vpack.c.b16 %v783, %v782
        %v846 = vpack.c.b16 %v785, %v784
        %v847 = vpack.c.b16 %v787, %v786
        %v848 = vpack.c.b16 %v789, %v788
        %v849 = vpack.c.b16 %v791, %v790
        %v850 = vpack.c.b16 %v793, %v792
        %v851 = vpack.c.b16 %v795, %v794
        %v852 = vpack.c.b16 %v797, %v796
        %v853 = vpack.c.b16 %v799, %v798
        %v854 = vpack.c.b16 %v801, %v800
        %v855 = vpack.c.b16 %v803, %v802
        %v856 = vpack.c.b16 %v805, %v804
        %v857 = vpack.c.b16 %v807, %v806
        %v858 = vpack.c.b16 %v809, %v808
        %vm908 = vcmask 130048
        %v910 = vsel %vm908, %v487, 0
        %v913 = vsel %vm908, %v494, 0
        %v916 = vsel %vm908, %v501, 0
        %v919 = vsel %vm908, %v508, 0
        %921 = vmatprep.subr.bf16.mxu0 0
        %922 = vmatpush1.bf16.msra.mxu0 %v810
        %923 = vmatprep.subr.bf16.mxu0 0
        %924 = vmatpush1.bf16.msra.mxu0 %v811
        %925 = vmatprep.subr.bf16.mxu0 0
        %926 = vmatpush1.bf16.msra.mxu0 %v812
        %927 = vmatprep.subr.bf16.mxu0 0
        %928 = vmatpush1.bf16.msra.mxu0 %v813
        %929 = vmatprep.subr.bf16.mxu0 0
        %930 = vmatpush1.bf16.msra.mxu0 %v814
        %931 = vmatprep.subr.bf16.mxu0 0
        %932 = vmatpush1.bf16.msra.mxu0 %v815
        %933 = vmatprep.subr.bf16.mxu0 0
        %934 = vmatpush1.bf16.msra.mxu0 %v816
        %935 = vmatprep.subr.bf16.mxu0 0
        %936 = vmatpush1.bf16.msra.mxu0 %v817
        %937 = vmatprep.subr.bf16.mxu0 0
        %938 = vmatpush1.bf16.msra.mxu0 %v818
        %939 = vmatprep.subr.bf16.mxu0 0
        %940 = vmatpush1.bf16.msra.mxu0 %v819
        %941 = vmatprep.subr.bf16.mxu0 0
        %942 = vmatpush1.bf16.msra.mxu0 %v820
        %943 = vmatprep.subr.bf16.mxu0 0
        %944 = vmatpush1.bf16.msra.mxu0 %v821
        %945 = vmatprep.subr.bf16.mxu0 0
        %946 = vmatpush1.bf16.msra.mxu0 %v822
        %947 = vmatprep.subr.bf16.mxu0 0
        %948 = vmatpush1.bf16.msra.mxu0 %v823
        %949 = vmatprep.subr.bf16.mxu0 0
        %950 = vmatpush1.bf16.msra.mxu0 %v824
        %951 = vmatprep.subr.bf16.mxu0 0
        %952 = vmatpush1.bf16.msra.mxu0 %v825
        %953 = vmatprep.mubr.bf16.mxu0 %v482
        %954 = vmatmul.mubr.bf16.gmra.mrb[0].mxu0 %v481
        %v955 = vpop.f32.mrb[0].mxu0
        %v956 = vadd.f32 %v612, %v955
        %v957 = vpop.f32.mrb[0].mxu0
        %v958 = vpop.f32.mrb[0].mxu0
        %v959 = vadd.f32 %v612, %v958
        %v960 = vpop.f32.mrb[0].mxu0
        %961 = vmatprep.mubr.bf16.mxu0 %v489
        %962 = vmatmul.mubr.bf16.gmra.mrb[0].mxu0 %v488
        %v963 = vpop.f32.mrb[0].mxu0
        %v964 = vadd.f32 %v612, %v963
        %v965 = vpop.f32.mrb[0].mxu0
        %v966 = vpop.f32.mrb[0].mxu0
        %v967 = vadd.f32 %v612, %v966
        %v968 = vpop.f32.mrb[0].mxu0
        %969 = vmatprep.mubr.bf16.mxu0 %v496
        %970 = vmatmul.mubr.bf16.gmra.mrb[0].mxu0 %v495
        %v971 = vpop.f32.mrb[0].mxu0
        %v972 = vadd.f32 %v612, %v971
        %v973 = vpop.f32.mrb[0].mxu0
        %v974 = vpop.f32.mrb[0].mxu0
        %v975 = vadd.f32 %v612, %v974
        %v976 = vpop.f32.mrb[0].mxu0
        %977 = vmatprep.mubr.bf16.mxu0 %v503
        %978 = vmatmul.mubr.bf16.gmra.mrb[0].mxu0 %v502
        %v979 = vpop.f32.mrb[0].mxu0
        %v980 = vadd.f32 %v612, %v979
        %v981 = vpop.f32.mrb[0].mxu0
        %v982 = vpop.f32.mrb[0].mxu0
        %v983 = vadd.f32 %v612, %v982
        %v984 = vpop.f32.mrb[0].mxu0
        %985 = vdwg.mxu0
        %986 = vmatprep.subr.bf16.mxu0 0
        %987 = vmatpush1.bf16.msra.mxu0 %v826
        %988 = vmatprep.subr.bf16.mxu0 0
        %989 = vmatpush1.bf16.msra.mxu0 %v827
        %990 = vmatprep.subr.bf16.mxu0 0
        %991 = vmatpush1.bf16.msra.mxu0 %v828
        %992 = vmatprep.subr.bf16.mxu0 0
        %993 = vmatpush1.bf16.msra.mxu0 %v829
        %994 = vmatprep.subr.bf16.mxu0 0
        %995 = vmatpush1.bf16.msra.mxu0 %v830
        %996 = vmatprep.subr.bf16.mxu0 0
        %997 = vmatpush1.bf16.msra.mxu0 %v831
        %998 = vmatprep.subr.bf16.mxu0 0
        %999 = vmatpush1.bf16.msra.mxu0 %v832
        %1000 = vmatprep.subr.bf16.mxu0 0
        %1001 = vmatpush1.bf16.msra.mxu0 %v833
        %1002 = vmatprep.subr.bf16.mxu0 0
        %1003 = vmatpush1.bf16.msra.mxu0 %v834
        %1004 = vmatprep.subr.bf16.mxu0 0
        %1005 = vmatpush1.bf16.msra.mxu0 %v835
        %1006 = vmatprep.subr.bf16.mxu0 0
        %1007 = vmatpush1.bf16.msra.mxu0 %v836
        %1008 = vmatprep.subr.bf16.mxu0 0
        %1009 = vmatpush1.bf16.msra.mxu0 %v837
        %1010 = vmatprep.subr.bf16.mxu0 0
        %1011 = vmatpush1.bf16.msra.mxu0 %v838
        %1012 = vmatprep.subr.bf16.mxu0 0
        %1013 = vmatpush1.bf16.msra.mxu0 %v839
        %1014 = vmatprep.subr.bf16.mxu0 0
        %1015 = vmatpush1.bf16.msra.mxu0 %v840
        %1016 = vmatprep.subr.bf16.mxu0 0
        %1017 = vmatpush1.bf16.msra.mxu0 %v841
        %1018 = vmatprep.mubr.bf16.mxu0 %v484
        %1019 = vmatmul.mubr.bf16.gmra.mrb[0].mxu0 %v483
        %v1020 = vpop.f32.mrb[0].mxu0
        %v1021 = vadd.f32 %v956, %v1020
        %v1022 = vpop.f32.mrb[0].mxu0
        %v1023 = vpop.f32.mrb[0].mxu0
        %v1024 = vadd.f32 %v959, %v1023
        %v1025 = vpop.f32.mrb[0].mxu0
        %1026 = vmatprep.mubr.bf16.mxu0 %v491
        %1027 = vmatmul.mubr.bf16.gmra.mrb[0].mxu0 %v490
        %v1028 = vpop.f32.mrb[0].mxu0
        %v1029 = vadd.f32 %v964, %v1028
        %v1030 = vpop.f32.mrb[0].mxu0
        %v1031 = vpop.f32.mrb[0].mxu0
        %v1032 = vadd.f32 %v967, %v1031
        %v1033 = vpop.f32.mrb[0].mxu0
        %1034 = vmatprep.mubr.bf16.mxu0 %v498
        %1035 = vmatmul.mubr.bf16.gmra.mrb[0].mxu0 %v497
        %v1036 = vpop.f32.mrb[0].mxu0
        %v1037 = vadd.f32 %v972, %v1036
        %v1038 = vpop.f32.mrb[0].mxu0
        %v1039 = vpop.f32.mrb[0].mxu0
        %v1040 = vadd.f32 %v975, %v1039
        %v1041 = vpop.f32.mrb[0].mxu0
        %1042 = vmatprep.mubr.bf16.mxu0 %v505
        %1043 = vmatmul.mubr.bf16.gmra.mrb[0].mxu0 %v504
        %v1044 = vpop.f32.mrb[0].mxu0
        %v1045 = vadd.f32 %v980, %v1044
        %v1046 = vpop.f32.mrb[0].mxu0
        %v1047 = vpop.f32.mrb[0].mxu0
        %v1048 = vadd.f32 %v983, %v1047
        %v1049 = vpop.f32.mrb[0].mxu0
        %1050 = vdwg.mxu0
        %1051 = vmatprep.subr.bf16.mxu0 0
        %1052 = vmatpush1.bf16.msra.mxu0 %v842
        %1053 = vmatprep.subr.bf16.mxu0 0
        %1054 = vmatpush1.bf16.msra.mxu0 %v843
        %1055 = vmatprep.subr.bf16.mxu0 0
        %1056 = vmatpush1.bf16.msra.mxu0 %v844
        %1057 = vmatprep.subr.bf16.mxu0 0
        %1058 = vmatpush1.bf16.msra.mxu0 %v845
        %1059 = vmatprep.subr.bf16.mxu0 0
        %1060 = vmatpush1.bf16.msra.mxu0 %v846
        %1061 = vmatprep.subr.bf16.mxu0 0
        %1062 = vmatpush1.bf16.msra.mxu0 %v847
        %1063 = vmatprep.subr.bf16.mxu0 0
        %1064 = vmatpush1.bf16.msra.mxu0 %v848
        %1065 = vmatprep.subr.bf16.mxu0 0
        %1066 = vmatpush1.bf16.msra.mxu0 %v849
        %1067 = vmatprep.subr.bf16.mxu0 0
        %1068 = vmatpush1.bf16.msra.mxu0 %v850
        %1069 = vmatprep.subr.bf16.mxu0 0
        %1070 = vmatpush1.bf16.msra.mxu0 %v851
        %1071 = vmatprep.subr.bf16.mxu0 0
        %1072 = vmatpush1.bf16.msra.mxu0 %v852
        %1073 = vmatprep.subr.bf16.mxu0 0
        %1074 = vmatpush1.bf16.msra.mxu0 %v853
        %1075 = vmatprep.subr.bf16.mxu0 0
        %1076 = vmatpush1.bf16.msra.mxu0 %v854
        %1077 = vmatprep.subr.bf16.mxu0 0
        %1078 = vmatpush1.bf16.msra.mxu0 %v855
        %1079 = vmatprep.subr.bf16.mxu0 0
        %1080 = vmatpush1.bf16.msra.mxu0 %v856
        %1081 = vmatprep.subr.bf16.mxu0 0
        %1082 = vmatpush1.bf16.msra.mxu0 %v857
        %1083 = vmatprep.mubr.bf16.mxu0 %v486
        %1084 = vmatmul.mubr.bf16.gmra.mrb[0].mxu0 %v485
        %v1085 = vpop.f32.mrb[0].mxu0
        %v1086 = vadd.f32 %v1021, %v1085
        %v1087 = vpop.f32.mrb[0].mxu0
        %v1088 = vpop.f32.mrb[0].mxu0
        %v1089 = vadd.f32 %v1024, %v1088
        %v1090 = vpop.f32.mrb[0].mxu0
        %1091 = vmatprep.mubr.bf16.mxu0 %v493
        %1092 = vmatmul.mubr.bf16.gmra.mrb[0].mxu0 %v492
        %v1093 = vpop.f32.mrb[0].mxu0
        %v1094 = vadd.f32 %v1029, %v1093
        %v1095 = vpop.f32.mrb[0].mxu0
        %v1096 = vpop.f32.mrb[0].mxu0
        %v1097 = vadd.f32 %v1032, %v1096
        %v1098 = vpop.f32.mrb[0].mxu0
        %1099 = vmatprep.mubr.bf16.mxu0 %v500
        %1100 = vmatmul.mubr.bf16.gmra.mrb[0].mxu0 %v499
        %v1101 = vpop.f32.mrb[0].mxu0
        %v1102 = vadd.f32 %v1037, %v1101
        %v1103 = vpop.f32.mrb[0].mxu0
        %v1104 = vpop.f32.mrb[0].mxu0
        %v1105 = vadd.f32 %v1040, %v1104
        %v1106 = vpop.f32.mrb[0].mxu0
        %1107 = vmatprep.mubr.bf16.mxu0 %v507
        %1108 = vmatmul.mubr.bf16.gmra.mrb[0].mxu0 %v506
        %v1109 = vpop.f32.mrb[0].mxu0
        %v1110 = vadd.f32 %v1045, %v1109
        %v1111 = vpop.f32.mrb[0].mxu0
        %v1112 = vpop.f32.mrb[0].mxu0
        %v1113 = vadd.f32 %v1048, %v1112
        %v1114 = vpop.f32.mrb[0].mxu0
        %1115 = vdwg.mxu0
        %1116 = vmatprep.subr.bf16.mxu0 0
        %1117 = vmatpush1.bf16.msra.mxu0 %v858
        %1118 = vmatprep.subr.bf16.mxu0 0
        %1119 = vmatpush1.bf16.msra.mxu0 0
        %1120 = vmatprep.subr.bf16.mxu0 0
        %1121 = vmatpush1.bf16.msra.mxu0 0
        %1122 = vmatprep.subr.bf16.mxu0 0
        %1123 = vmatpush1.bf16.msra.mxu0 0
        %1124 = vmatprep.subr.bf16.mxu0 0
        %1125 = vmatpush1.bf16.msra.mxu0 0
        %1126 = vmatprep.subr.bf16.mxu0 0
        %1127 = vmatpush1.bf16.msra.mxu0 0
        %1128 = vmatprep.subr.bf16.mxu0 0
        %1129 = vmatpush1.bf16.msra.mxu0 0
        %1130 = vmatprep.subr.bf16.mxu0 0
        %1131 = vmatpush1.bf16.msra.mxu0 0
        %1132 = vmatprep.subr.bf16.mxu0 0
        %1133 = vmatpush1.bf16.msra.mxu0 0
        %1134 = vmatprep.subr.bf16.mxu0 0
        %1135 = vmatpush1.bf16.msra.mxu0 0
        %1136 = vmatprep.subr.bf16.mxu0 0
        %1137 = vmatpush1.bf16.msra.mxu0 0
        %1138 = vmatprep.subr.bf16.mxu0 0
        %1139 = vmatpush1.bf16.msra.mxu0 0
        %1140 = vmatprep.subr.bf16.mxu0 0
        %1141 = vmatpush1.bf16.msra.mxu0 0
        %1142 = vmatprep.subr.bf16.mxu0 0
        %1143 = vmatpush1.bf16.msra.mxu0 0
        %1144 = vmatprep.subr.bf16.mxu0 0
        %1145 = vmatpush1.bf16.msra.mxu0 0
        %1146 = vmatprep.subr.bf16.mxu0 0
        %1147 = vmatpush1.bf16.msra.mxu0 0
        %1148 = vmatprep.mubr.bf16.mxu0 0
        %1149 = vmatmul.mubr.bf16.gmra.mrb[0].mxu0 %v910
        %v1150 = vpop.f32.mrb[0].mxu0
        %v1151 = vadd.f32 %v1086, %v1150
        %v1152 = vpop.f32.mrb[0].mxu0
        %v1153 = vpop.f32.mrb[0].mxu0
        %v1154 = vadd.f32 %v1089, %v1153
        %v1155 = vpop.f32.mrb[0].mxu0
        %1156 = vmatprep.mubr.bf16.mxu0 0
        %1157 = vmatmul.mubr.bf16.gmra.mrb[0].mxu0 %v913
        %v1158 = vpop.f32.mrb[0].mxu0
        %v1159 = vadd.f32 %v1094, %v1158
        %v1160 = vpop.f32.mrb[0].mxu0
        %v1161 = vpop.f32.mrb[0].mxu0
        %v1162 = vadd.f32 %v1097, %v1161
        %v1163 = vpop.f32.mrb[0].mxu0
        %1164 = vmatprep.mubr.bf16.mxu0 0
        %1165 = vmatmul.mubr.bf16.gmra.mrb[0].mxu0 %v916
        %v1166 = vpop.f32.mrb[0].mxu0
        %v1167 = vadd.f32 %v1102, %v1166
        %v1168 = vpop.f32.mrb[0].mxu0
        %v1169 = vpop.f32.mrb[0].mxu0
        %v1170 = vadd.f32 %v1105, %v1169
        %v1171 = vpop.f32.mrb[0].mxu0
        %1172 = vmatprep.mubr.bf16.mxu0 0
        %1173 = vmatmul.mubr.bf16.gmra.mrb[0].mxu0 %v919
        %v1174 = vpop.f32.mrb[0].mxu0
        %v1175 = vadd.f32 %v1110, %v1174
        %v1176 = vpop.f32.mrb[0].mxu0
        %v1177 = vpop.f32.mrb[0].mxu0
        %v1178 = vadd.f32 %v1113, %v1177
        %v1179 = vpop.f32.mrb[0].mxu0
        %1180 = vdwg.mxu0
        %v1181 = vmax.f32 %v1151, 0.0
        %v1182 = vmax.f32 %v1154, 0.0
        %v1183 = vmax.f32 %v1159, 0.0
        %v1184 = vmax.f32 %v1162, 0.0
        %v1185 = vmax.f32 %v1167, 0.0
        %v1186 = vmax.f32 %v1170, 0.0
        %v1187 = vmax.f32 %v1175, 0.0
        %v1188 = vmax.f32 %v1178, 0.0
        %v1189 = vpack.c.bf16 %v1182, %v1181
        %v1190 = vpack.c.bf16 %v1184, %v1183
        %v1191 = vpack.c.bf16 %v1186, %v1185
        %v1192 = vpack.c.bf16 %v1188, %v1187
        %v1193 = vld [vmem:[%s3] sm:$0xf]
        %v1194 = vld [vmem:[%s3 + $0x4] sm:$0xf]
        %v1195 = vld [vmem:[%s3 + $0x8] sm:$0xf]
        %v1196 = vld [vmem:[%s3 + $0xc] sm:$0xf]
        %v1197 = vld [vmem:[%s3 + $0x10] sm:$0xf]
        %v1198 = vld [vmem:[%s3 + $0x14] sm:$0xf]
        %v1199 = vld [vmem:[%s3 + $0x18] sm:$0xf]
        %v1200 = vld [vmem:[%s3 + $0x1c] sm:$0xf]
        %v1201 = vld [vmem:[%s3 + $0x20] sm:$0xf]
        %v1202 = vld [vmem:[%s3 + $0x24] sm:$0xf]
        %v1203 = vld [vmem:[%s4] sm:$0x1]
        %v1205 = vlaneseq
        %v1206 = vshrl.u32 %v1205, 7
        %v1207 = vsub.s32 0, %v1206
        %v1208 = vrot.slane %v1203, %v1207
        %v1220 = vunpack.c.l.b16 %v1193
        %v1221 = vunpack.c.l.b16 %v1194
        %v1222 = vunpack.c.l.b16 %v1195
        %v1223 = vunpack.c.l.b16 %v1196
        %v1224 = vunpack.c.l.b16 %v1197
        %v1225 = vunpack.c.l.b16 %v1198
        %v1226 = vunpack.c.l.b16 %v1199
        %v1227 = vunpack.c.l.b16 %v1200
        %v1228 = vunpack.c.l.b16 %v1201
        %v1229 = vunpack.c.l.b16 %v1202
        %v1230 = vpack.c.b16 %v1221, %v1220
        %v1231 = vpack.c.b16 %v1223, %v1222
        %v1232 = vpack.c.b16 %v1225, %v1224
        %v1233 = vpack.c.b16 %v1227, %v1226
        %v1234 = vpack.c.b16 %v1229, %v1228
        %vm1240 = vcmask 654336
        %v1242 = vsel %vm1240, %v1189, 0
        %v1245 = vsel %vm1240, %v1190, 0
        %v1248 = vsel %vm1240, %v1191, 0
        %v1251 = vsel %vm1240, %v1192, 0
        %1253 = vmatprep.subr.bf16.mxu0 0
        %1254 = vmatpush1.bf16.msra.mxu0 %v1230
        %1255 = vmatprep.subr.bf16.mxu0 0
        %1256 = vmatpush1.bf16.msra.mxu0 %v1231
        %1257 = vmatprep.subr.bf16.mxu0 0
        %1258 = vmatpush1.bf16.msra.mxu0 %v1232
        %1259 = vmatprep.subr.bf16.mxu0 0
        %1260 = vmatpush1.bf16.msra.mxu0 %v1233
        %1261 = vmatprep.subr.bf16.mxu0 0
        %1262 = vmatpush1.bf16.msra.mxu0 %v1234
        %1263 = vmatprep.subr.bf16.mxu0 0
        %1264 = vmatpush1.bf16.msra.mxu0 0
        %1265 = vmatprep.subr.bf16.mxu0 0
        %1266 = vmatpush1.bf16.msra.mxu0 0
        %1267 = vmatprep.subr.bf16.mxu0 0
        %1268 = vmatpush1.bf16.msra.mxu0 0
        %1269 = vmatprep.subr.bf16.mxu0 0
        %1270 = vmatpush1.bf16.msra.mxu0 0
        %1271 = vmatprep.subr.bf16.mxu0 0
        %1272 = vmatpush1.bf16.msra.mxu0 0
        %1273 = vmatprep.subr.bf16.mxu0 0
        %1274 = vmatpush1.bf16.msra.mxu0 0
        %1275 = vmatprep.subr.bf16.mxu0 0
        %1276 = vmatpush1.bf16.msra.mxu0 0
        %1277 = vmatprep.subr.bf16.mxu0 0
        %1278 = vmatpush1.bf16.msra.mxu0 0
        %1279 = vmatprep.subr.bf16.mxu0 0
        %1280 = vmatpush1.bf16.msra.mxu0 0
        %1281 = vmatprep.subr.bf16.mxu0 0
        %1282 = vmatpush1.bf16.msra.mxu0 0
        %1283 = vmatprep.subr.bf16.mxu0 0
        %1284 = vmatpush1.bf16.msra.mxu0 0
        %1285 = vmatprep.mubr.bf16.mxu0 0
        %1286 = vmatmul.mubr.bf16.gmra.mrb[0].mxu0 %v1242
        %v1287 = vpop.f32.mrb[0].mxu0
        %v1288 = vadd.f32 %v1208, %v1287
        %v1289 = vpop.f32.mrb[0].mxu0
        %v1290 = vpop.f32.mrb[0].mxu0
        %v1291 = vadd.f32 %v1208, %v1290
        %v1292 = vpop.f32.mrb[0].mxu0
        %1293 = vmatprep.mubr.bf16.mxu0 0
        %1294 = vmatmul.mubr.bf16.gmra.mrb[0].mxu0 %v1245
        %v1295 = vpop.f32.mrb[0].mxu0
        %v1296 = vadd.f32 %v1208, %v1295
        %v1297 = vpop.f32.mrb[0].mxu0
        %v1298 = vpop.f32.mrb[0].mxu0
        %v1299 = vadd.f32 %v1208, %v1298
        %v1300 = vpop.f32.mrb[0].mxu0
        %1301 = vmatprep.mubr.bf16.mxu0 0
        %1302 = vmatmul.mubr.bf16.gmra.mrb[0].mxu0 %v1248
        %v1303 = vpop.f32.mrb[0].mxu0
        %v1304 = vadd.f32 %v1208, %v1303
        %v1305 = vpop.f32.mrb[0].mxu0
        %v1306 = vpop.f32.mrb[0].mxu0
        %v1307 = vadd.f32 %v1208, %v1306
        %v1308 = vpop.f32.mrb[0].mxu0
        %1309 = vmatprep.mubr.bf16.mxu0 0
        %1310 = vmatmul.mubr.bf16.gmra.mrb[0].mxu0 %v1251
        %v1311 = vpop.f32.mrb[0].mxu0
        %v1312 = vadd.f32 %v1208, %v1311
        %v1313 = vpop.f32.mrb[0].mxu0
        %v1314 = vpop.f32.mrb[0].mxu0
        %v1315 = vadd.f32 %v1208, %v1314
        %v1316 = vpop.f32.mrb[0].mxu0
        %1317 = vdwg.mxu0
        %v1318 = vmax.f32 %v1288, 0.0
        %v1319 = vmax.f32 %v1291, 0.0
        %v1320 = vmax.f32 %v1296, 0.0
        %v1321 = vmax.f32 %v1299, 0.0
        %v1322 = vmax.f32 %v1304, 0.0
        %v1323 = vmax.f32 %v1307, 0.0
        %v1324 = vmax.f32 %v1312, 0.0
        %v1325 = vmax.f32 %v1315, 0.0
        %v1326 = vpack.c.bf16 %v1319, %v1318
        %v1327 = vpack.c.bf16 %v1321, %v1320
        %v1328 = vpack.c.bf16 %v1323, %v1322
        %v1329 = vpack.c.bf16 %v1325, %v1324
        %v1330 = vld [vmem:[%s5] sm:$0xf]
        %v1331 = vld [vmem:[%s5 + $0x4] sm:$0xf]
        %v1332 = vld [vmem:[%s5 + $0x8] sm:$0xf]
        %v1333 = vld [vmem:[%s5 + $0xc] sm:$0xf]
        %v1334 = vld [vmem:[%s5 + $0x10] sm:$0xf]
        %v1335 = vld [vmem:[%s6] sm:$0x1]
        %v1337 = vlaneseq
        %v1338 = vshrl.u32 %v1337, 7
        %v1339 = vsub.s32 0, %v1338
        %v1340 = vrot.slane %v1335, %v1339
        %v1347 = vunpack.c.l.b16 %v1330
        %v1348 = vunpack.c.l.b16 %v1331
        %v1349 = vunpack.c.l.b16 %v1332
        %v1350 = vunpack.c.l.b16 %v1333
        %v1351 = vunpack.c.l.b16 %v1334
        %v1352 = vpack.c.b16 %v1348, %v1347
        %v1353 = vpack.c.b16 %v1350, %v1349
        %v1354 = vpack.c.b16 %v1351, %v1351
        %vm1357 = vcmask 326656
        %v1359 = vsel %vm1357, %v1326, 0
        %v1362 = vsel %vm1357, %v1327, 0
        %v1365 = vsel %vm1357, %v1328, 0
        %v1368 = vsel %vm1357, %v1329, 0
        %vm1370 = vcmask 1043456
        %v1372 = vsel %vm1370, %v1354, 0
        %1374 = vmatprep.subr.bf16.mxu0 0
        %1375 = vmatpush1.bf16.msra.mxu0 %v1352
        %1376 = vmatprep.subr.bf16.mxu0 0
        %1377 = vmatpush1.bf16.msra.mxu0 %v1353
        %1378 = vmatprep.subr.bf16.mxu0 0
        %1379 = vmatpush1.bf16.msra.mxu0 %v1372
        %1380 = vmatprep.subr.bf16.mxu0 0
        %1381 = vmatpush1.bf16.msra.mxu0 0
        %1382 = vmatprep.subr.bf16.mxu0 0
        %1383 = vmatpush1.bf16.msra.mxu0 0
        %1384 = vmatprep.subr.bf16.mxu0 0
        %1385 = vmatpush1.bf16.msra.mxu0 0
        %1386 = vmatprep.subr.bf16.mxu0 0
        %1387 = vmatpush1.bf16.msra.mxu0 0
        %1388 = vmatprep.subr.bf16.mxu0 0
        %1389 = vmatpush1.bf16.msra.mxu0 0
        %1390 = vmatprep.subr.bf16.mxu0 0
        %1391 = vmatpush1.bf16.msra.mxu0 0
        %1392 = vmatprep.subr.bf16.mxu0 0
        %1393 = vmatpush1.bf16.msra.mxu0 0
        %1394 = vmatprep.subr.bf16.mxu0 0
        %1395 = vmatpush1.bf16.msra.mxu0 0
        %1396 = vmatprep.subr.bf16.mxu0 0
        %1397 = vmatpush1.bf16.msra.mxu0 0
        %1398 = vmatprep.subr.bf16.mxu0 0
        %1399 = vmatpush1.bf16.msra.mxu0 0
        %1400 = vmatprep.subr.bf16.mxu0 0
        %1401 = vmatpush1.bf16.msra.mxu0 0
        %1402 = vmatprep.subr.bf16.mxu0 0
        %1403 = vmatpush1.bf16.msra.mxu0 0
        %1404 = vmatprep.subr.bf16.mxu0 0
        %1405 = vmatpush1.bf16.msra.mxu0 0
        %1406 = vmatprep.mubr.bf16.mxu0 0
        %1407 = vmatmul.mubr.bf16.gmra.mrb[0].mxu0 %v1359
        %v1408 = vpop.f32.mrb[0].mxu0
        %v1409 = vadd.f32 %v1340, %v1408
        %v1410 = vpop.f32.mrb[0].mxu0
        %v1411 = vpop.f32.mrb[0].mxu0
        %v1412 = vadd.f32 %v1340, %v1411
        %v1413 = vpop.f32.mrb[0].mxu0
        %1414 = vmatprep.mubr.bf16.mxu0 0
        %1415 = vmatmul.mubr.bf16.gmra.mrb[0].mxu0 %v1362
        %v1416 = vpop.f32.mrb[0].mxu0
        %v1417 = vadd.f32 %v1340, %v1416
        %v1418 = vpop.f32.mrb[0].mxu0
        %v1419 = vpop.f32.mrb[0].mxu0
        %v1420 = vadd.f32 %v1340, %v1419
        %v1421 = vpop.f32.mrb[0].mxu0
        %1422 = vmatprep.mubr.bf16.mxu0 0
        %1423 = vmatmul.mubr.bf16.gmra.mrb[0].mxu0 %v1365
        %v1424 = vpop.f32.mrb[0].mxu0
        %v1425 = vadd.f32 %v1340, %v1424
        %v1426 = vpop.f32.mrb[0].mxu0
        %v1427 = vpop.f32.mrb[0].mxu0
        %v1428 = vadd.f32 %v1340, %v1427
        %v1429 = vpop.f32.mrb[0].mxu0
        %1430 = vmatprep.mubr.bf16.mxu0 0
        %1431 = vmatmul.mubr.bf16.gmra.mrb[0].mxu0 %v1368
        %v1432 = vpop.f32.mrb[0].mxu0
        %v1433 = vadd.f32 %v1340, %v1432
        %v1434 = vpop.f32.mrb[0].mxu0
        %v1435 = vpop.f32.mrb[0].mxu0
        %v1436 = vadd.f32 %v1340, %v1435
        %v1437 = vpop.f32.mrb[0].mxu0
        %1438 = vdwg.mxu0
        %v1439 = vmax.f32 %v1409, 0.0
        %v1440 = vmax.f32 %v1412, 0.0
        %v1441 = vmax.f32 %v1417, 0.0
        %v1442 = vmax.f32 %v1420, 0.0
        %v1443 = vmax.f32 %v1425, 0.0
        %v1444 = vmax.f32 %v1428, 0.0
        %v1445 = vmax.f32 %v1433, 0.0
        %v1446 = vmax.f32 %v1436, 0.0
        %v1447 = vpack.c.bf16 %v1440, %v1439
        %v1448 = vpack.c.bf16 %v1442, %v1441
        %v1449 = vpack.c.bf16 %v1444, %v1443
        %v1450 = vpack.c.bf16 %v1446, %v1445
        %v1451 = vld [vmem:[%s7] sm:$0xf]
        %v1452 = vld [vmem:[%s7 + $0x4] sm:$0xf]
        %v1453 = vld [vmem:[%s7 + $0x8] sm:$0xf]
        %v1454 = vld [vmem:[%s7 + $0xc] sm:$0xf]
        %v1455 = vld [vmem:[%s7 + $0x10] sm:$0xf]
        %v1456 = vld [vmem:[%s8] sm:$0x1]
        %v1458 = vlaneseq
        %v1459 = vshrl.u32 %v1458, 7
        %v1460 = vsub.s32 0, %v1459
        %v1461 = vrot.slane %v1456, %v1460
        %v1468 = vunpack.c.l.b16 %v1451
        %v1469 = vunpack.c.l.b16 %v1452
        %v1470 = vunpack.c.l.b16 %v1453
        %v1471 = vunpack.c.l.b16 %v1454
        %v1472 = vunpack.c.l.b16 %v1455
        %v1473 = vpack.c.b16 %v1469, %v1468
        %v1474 = vpack.c.b16 %v1471, %v1470
        %v1475 = vpack.c.b16 %v1472, %v1472
        %v1479 = vsel %vm1357, %v1447, 0
        %v1482 = vsel %vm1357, %v1448, 0
        %v1485 = vsel %vm1357, %v1449, 0
        %v1488 = vsel %vm1357, %v1450, 0
        %v1491 = vsel %vm1370, %v1475, 0
        %1493 = vmatprep.subr.bf16.mxu0 0
        %1494 = vmatpush1.bf16.msra.mxu0 %v1473
        %1495 = vmatprep.subr.bf16.mxu0 0
        %1496 = vmatpush1.bf16.msra.mxu0 %v1474
        %1497 = vmatprep.subr.bf16.mxu0 0
        %1498 = vmatpush1.bf16.msra.mxu0 %v1491
        %1499 = vmatprep.subr.bf16.mxu0 0
        %1500 = vmatpush1.bf16.msra.mxu0 0
        %1501 = vmatprep.subr.bf16.mxu0 0
        %1502 = vmatpush1.bf16.msra.mxu0 0
        %1503 = vmatprep.subr.bf16.mxu0 0
        %1504 = vmatpush1.bf16.msra.mxu0 0
        %1505 = vmatprep.subr.bf16.mxu0 0
        %1506 = vmatpush1.bf16.msra.mxu0 0
        %1507 = vmatprep.subr.bf16.mxu0 0
        %1508 = vmatpush1.bf16.msra.mxu0 0
        %1509 = vmatprep.subr.bf16.mxu0 0
        %1510 = vmatpush1.bf16.msra.mxu0 0
        %1511 = vmatprep.subr.bf16.mxu0 0
        %1512 = vmatpush1.bf16.msra.mxu0 0
        %1513 = vmatprep.subr.bf16.mxu0 0
        %1514 = vmatpush1.bf16.msra.mxu0 0
        %1515 = vmatprep.subr.bf16.mxu0 0
        %1516 = vmatpush1.bf16.msra.mxu0 0
        %1517 = vmatprep.subr.bf16.mxu0 0
        %1518 = vmatpush1.bf16.msra.mxu0 0
        %1519 = vmatprep.subr.bf16.mxu0 0
        %1520 = vmatpush1.bf16.msra.mxu0 0
        %1521 = vmatprep.subr.bf16.mxu0 0
        %1522 = vmatpush1.bf16.msra.mxu0 0
        %1523 = vmatprep.subr.bf16.mxu0 0
        %1524 = vmatpush1.bf16.msra.mxu0 0
        %1525 = vmatprep.mubr.bf16.mxu0 0
        %1526 = vmatmul.mubr.bf16.gmra.mrb[0].mxu0 %v1479
        %v1527 = vpop.f32.mrb[0].mxu0
        %v1528 = vadd.f32 %v1461, %v1527
        %v1529 = vpop.f32.mrb[0].mxu0
        %v1530 = vpop.f32.mrb[0].mxu0
        %v1531 = vadd.f32 %v1461, %v1530
        %v1532 = vpop.f32.mrb[0].mxu0
        %1533 = vmatprep.mubr.bf16.mxu0 0
        %1534 = vmatmul.mubr.bf16.gmra.mrb[0].mxu0 %v1482
        %v1535 = vpop.f32.mrb[0].mxu0
        %v1536 = vadd.f32 %v1461, %v1535
        %v1537 = vpop.f32.mrb[0].mxu0
        %v1538 = vpop.f32.mrb[0].mxu0
        %v1539 = vadd.f32 %v1461, %v1538
        %v1540 = vpop.f32.mrb[0].mxu0
        %1541 = vmatprep.mubr.bf16.mxu0 0
        %1542 = vmatmul.mubr.bf16.gmra.mrb[0].mxu0 %v1485
        %v1543 = vpop.f32.mrb[0].mxu0
        %v1544 = vadd.f32 %v1461, %v1543
        %v1545 = vpop.f32.mrb[0].mxu0
        %v1546 = vpop.f32.mrb[0].mxu0
        %v1547 = vadd.f32 %v1461, %v1546
        %v1548 = vpop.f32.mrb[0].mxu0
        %1549 = vmatprep.mubr.bf16.mxu0 0
        %1550 = vmatmul.mubr.bf16.gmra.mrb[0].mxu0 %v1488
        %v1551 = vpop.f32.mrb[0].mxu0
        %v1552 = vadd.f32 %v1461, %v1551
        %v1553 = vpop.f32.mrb[0].mxu0
        %v1554 = vpop.f32.mrb[0].mxu0
        %v1555 = vadd.f32 %v1461, %v1554
        %v1556 = vpop.f32.mrb[0].mxu0
        %1557 = vdwg.mxu0
        %v1558 = vmax.f32 %v1528, 0.0
        %v1559 = vmax.f32 %v1531, 0.0
        %v1560 = vmax.f32 %v1536, 0.0
        %v1561 = vmax.f32 %v1539, 0.0
        %v1562 = vmax.f32 %v1544, 0.0
        %v1563 = vmax.f32 %v1547, 0.0
        %v1564 = vmax.f32 %v1552, 0.0
        %v1565 = vmax.f32 %v1555, 0.0
        %v1566 = vpack.c.bf16 %v1559, %v1558
        %v1567 = vpack.c.bf16 %v1561, %v1560
        %v1568 = vpack.c.bf16 %v1563, %v1562
        %v1569 = vpack.c.bf16 %v1565, %v1564
        %v1570 = vld [vmem:[%s9] sm:$0xf]
        %v1571 = vld [vmem:[%s9 + $0x4] sm:$0xf]
        %v1572 = vld [vmem:[%s9 + $0x8] sm:$0x3]
        %v1573 = vld [vmem:[%s10] sm:$0x1]
        %v1575 = vlaneseq
        %v1576 = vshrl.u32 %v1575, 7
        %v1577 = vsub.s32 0, %v1576
        %v1578 = vrot.slane %v1573, %v1577
        %v1583 = vunpack.c.l.b16 %v1570
        %v1584 = vunpack.c.l.b16 %v1571
        %v1585 = vunpack.c.l.b16 %v1572
        %v1586 = vpack.c.b16 %v1584, %v1583
        %v1587 = vpack.c.b16 %v1585, %v1585
        %vm1589 = vcmask 162816
        %v1591 = vsel %vm1589, %v1566, 0
        %v1594 = vsel %vm1589, %v1567, 0
        %v1597 = vsel %vm1589, %v1568, 0
        %v1600 = vsel %vm1589, %v1569, 0
        %vm1602 = vcmask 1041408
        %v1604 = vsel %vm1602, %v1587, 0
        %1606 = vmatprep.subr.bf16.mxu0 0
        %1607 = vmatpush1.bf16.msra.mxu0 %v1586
        %1608 = vmatprep.subr.bf16.mxu0 0
        %1609 = vmatpush1.bf16.msra.mxu0 %v1604
        %1610 = vmatprep.subr.bf16.mxu0 0
        %1611 = vmatpush1.bf16.msra.mxu0 0
        %1612 = vmatprep.subr.bf16.mxu0 0
        %1613 = vmatpush1.bf16.msra.mxu0 0
        %1614 = vmatprep.subr.bf16.mxu0 0
        %1615 = vmatpush1.bf16.msra.mxu0 0
        %1616 = vmatprep.subr.bf16.mxu0 0
        %1617 = vmatpush1.bf16.msra.mxu0 0
        %1618 = vmatprep.subr.bf16.mxu0 0
        %1619 = vmatpush1.bf16.msra.mxu0 0
        %1620 = vmatprep.subr.bf16.mxu0 0
        %1621 = vmatpush1.bf16.msra.mxu0 0
        %1622 = vmatprep.subr.bf16.mxu0 0
        %1623 = vmatpush1.bf16.msra.mxu0 0
        %1624 = vmatprep.subr.bf16.mxu0 0
        %1625 = vmatpush1.bf16.msra.mxu0 0
        %1626 = vmatprep.subr.bf16.mxu0 0
        %1627 = vmatpush1.bf16.msra.mxu0 0
        %1628 = vmatprep.subr.bf16.mxu0 0
        %1629 = vmatpush1.bf16.msra.mxu0 0
        %1630 = vmatprep.subr.bf16.mxu0 0
        %1631 = vmatpush1.bf16.msra.mxu0 0
        %1632 = vmatprep.subr.bf16.mxu0 0
        %1633 = vmatpush1.bf16.msra.mxu0 0
        %1634 = vmatprep.subr.bf16.mxu0 0
        %1635 = vmatpush1.bf16.msra.mxu0 0
        %1636 = vmatprep.subr.bf16.mxu0 0
        %1637 = vmatpush1.bf16.msra.mxu0 0
        %1638 = vmatprep.mubr.bf16.mxu0 0
        %1639 = vmatmul.mubr.bf16.gmra.mrb[0].mxu0 %v1591
        %v1640 = vpop.f32.mrb[0].mxu0
        %v1641 = vadd.f32 %v1578, %v1640
        %v1642 = vpop.f32.mrb[0].mxu0
        %v1643 = vpop.f32.mrb[0].mxu0
        %v1644 = vadd.f32 %v1578, %v1643
        %v1645 = vpop.f32.mrb[0].mxu0
        %1646 = vmatprep.mubr.bf16.mxu0 0
        %1647 = vmatmul.mubr.bf16.gmra.mrb[0].mxu0 %v1594
        %v1648 = vpop.f32.mrb[0].mxu0
        %v1649 = vadd.f32 %v1578, %v1648
        %v1650 = vpop.f32.mrb[0].mxu0
        %v1651 = vpop.f32.mrb[0].mxu0
        %v1652 = vadd.f32 %v1578, %v1651
        %v1653 = vpop.f32.mrb[0].mxu0
        %1654 = vmatprep.mubr.bf16.mxu0 0
        %1655 = vmatmul.mubr.bf16.gmra.mrb[0].mxu0 %v1597
        %v1656 = vpop.f32.mrb[0].mxu0
        %v1657 = vadd.f32 %v1578, %v1656
        %v1658 = vpop.f32.mrb[0].mxu0
        %v1659 = vpop.f32.mrb[0].mxu0
        %v1660 = vadd.f32 %v1578, %v1659
        %v1661 = vpop.f32.mrb[0].mxu0
        %1662 = vmatprep.mubr.bf16.mxu0 0
        %1663 = vmatmul.mubr.bf16.gmra.mrb[0].mxu0 %v1600
        %v1664 = vpop.f32.mrb[0].mxu0
        %v1665 = vadd.f32 %v1578, %v1664
        %v1666 = vpop.f32.mrb[0].mxu0
        %v1667 = vpop.f32.mrb[0].mxu0
        %v1668 = vadd.f32 %v1578, %v1667
        %v1669 = vpop.f32.mrb[0].mxu0
        %1670 = vdwg.mxu0
        %v1671 = vpack.c.bf16 %v1644, %v1641
        %v1672 = vpack.c.bf16 %v1652, %v1649
        %v1673 = vpack.c.bf16 %v1660, %v1657
        %v1674 = vpack.c.bf16 %v1668, %v1665
        %v1679 = vunpack.c.l.b16 %v1671
        %v1680 = vunpack.c.h.b16 %v1671
        %v1681 = vunpack.c.l.b16 %v1672
        %v1682 = vunpack.c.h.b16 %v1672
        %v1683 = vunpack.c.l.b16 %v1673
        %v1684 = vunpack.c.h.b16 %v1673
        %v1685 = vunpack.c.l.b16 %v1674
        %v1686 = vunpack.c.h.b16 %v1674
        %v1687 = vpack.c.b16 %v1679, %v1679
        %v1688 = vpack.c.b16 %v1680, %v1680
        %v1689 = vpack.c.b16 %v1681, %v1681
        %v1690 = vpack.c.b16 %v1682, %v1682
        %v1691 = vpack.c.b16 %v1683, %v1683
        %v1692 = vpack.c.b16 %v1684, %v1684
        %v1693 = vpack.c.b16 %v1685, %v1685
        %v1694 = vpack.c.b16 %v1686, %v1686
        %1703 = vst [vmem:[%s412] sm:$0xf] %v1687
        %1704 = vst [vmem:[%s412 + $0x4] sm:$0xf] %v1688
        %1705 = vst [vmem:[%s412 + $0x8] sm:$0xf] %v1689
        %1706 = vst [vmem:[%s412 + $0xc] sm:$0xf] %v1690
        %1707 = vst [vmem:[%s412 + $0x10] sm:$0xf] %v1691
        %1708 = vst [vmem:[%s412 + $0x14] sm:$0xf] %v1692
        %1709 = vst [vmem:[%s412 + $0x18] sm:$0xf] %v1693
        %1710 = vst [vmem:[%s412 + $0x1c] sm:$0xf] %v1694
        %s1711 = sand.u32 %s272, 1
        %s1712 = scalar_lea.sflag [#allocation4], %s1711
        %s1713 = sand.u32 %s272, 1
        %s1714 = smul.addr %s1713, 32
        %s1715 = scalar_lea.vmem [#allocation5], %s1714
        // Predicated region
        $region69: #{tpu_custom_call.1} parent=63 // pred_check
          %p1716 = pneg %p282
        $region70: #{tpu_custom_call.1} parent=63 // pred_check_branch
          %1718 = sbr.rel (%p1716) target = $region72
        $region71: #{tpu_custom_call.1} parent=63 // pred_region
          %s1719 = smul.u32 8, %s28
          %s1720 = ssub.s32 25, %s1719
          %p1721 = scmp.lt.s32.totalorder %s1720, 8
          %s1722 = scalar_select %p1721, %s1720, 8
          %s1723 = smul.u32 64, %s1722
          %s1725 = ssub.s32 512, %s1723
          %1726 = vsyncadd %s1712, %s1725
          %p1727 = scmp.ne.s32.totalorder 0, %s1723
          %s1728 = smul.addr %s1719, 64
          %s1729 = scalar_lea.hbm %s11, %s1728
          %s1730 = smul.u32 4, %s1722
          %s1731 = sshll.u32 %s1715, 4
          %s1732 = int_to_ptr.vmem [resolvable:$true] %s1731
          %s1733 = sshll.u32 %s1730, 4
          %1737 = dma.vmem_to_hbm [thread:$0]  (%p1727), %s1732, %s1733, %s1729, %s1712, 64, 64, 4
        $region72: #{tpu_custom_call.1} parent=63 // pred_fallthru
          _
      $region64: #{tpu_custom_call.1} parent=5 // pred_fallthru
        _
      %p1738 = scmp.le.s32.totalorder 2, %s23
      // Predicated region
      $region73: #{tpu_custom_call.1} parent=5 // pred_check
        %p1739 = pneg %p1738
      $region74: #{tpu_custom_call.1} parent=5 // pred_check_branch
        %1741 = sbr.rel (%p1739) target = $region76
      $region75: #{tpu_custom_call.1} parent=5 // pred_region
        %s1742 = ssub.s32 %s23, 2
        // Predicated region
        $region77: #{tpu_custom_call.1} parent=75 // pred_check
          %p1743 = pneg %p288
        $region78: #{tpu_custom_call.1} parent=75 // pred_check_branch
          %1745 = sbr.rel (%p1743) target = $region80
        $region79: #{tpu_custom_call.1} parent=75 // pred_region
          %s1746 = sand.u32 %s273, 1
          %s1747 = scalar_lea.sflag [#allocation4], %s1746
          %s1748 = sand.u32 %s273, 1
          %s1749 = smul.addr %s1748, 32
          %s1750 = scalar_lea.vmem [#allocation5], %s1749
          %1751 = dma.done %s1747, 512
        $region80: #{tpu_custom_call.1} parent=75 // pred_fallthru
          _
      $region76: #{tpu_custom_call.1} parent=5 // pred_fallthru
        _
    $region6: #{tpu_custom_call.1} parent=1 // loop_footer
      %s27 = sadd.s32 1, %s23
    $region7: #{tpu_custom_call.1} parent=1 // loop_footer_branch
      %22 = sbr.rel target = $region3
    $region8: #{tpu_custom_call.1} parent=1 // loop_exit
      _
    %1752 = vsyncpa [#allocation3], 1
    %s1753 = scalar_lea.sflag [#allocation3], 1
    %1754 = vsyncpa %s1753, 1
    %1755 = vsyncpa [#allocation4], 1
    %s1756 = scalar_lea.sflag [#allocation4], 1
    %1757 = vsyncpa %s1756, 1

</llo_original>
